<compile_context>
chip_gen: v6e
topology: v6e:2x2x1
jax: 0.10.0
libtpu: 0.0.40
codegen_flags: <defaults>
</compile_context>

<pallas_src>
import functools

import jax
import jax.numpy as jnp
from jax.experimental import pallas as pl
from jax.experimental.pallas import tpu as pltpu


def _layer_norm(x, eps=1e-5):
    # torch LayerNorm(elementwise_affine=False): biased variance, eps=1e-5.
    mu = jnp.mean(x, axis=-1, keepdims=True)
    xc = x - mu
    var = jnp.mean(xc * xc, axis=-1, keepdims=True)
    return xc * jax.lax.rsqrt(var + eps)


def encoder_layer_kernel(x_ref, mask_ref,
                         wqkv_ref, bqkv_ref, wo_ref, bo_ref,
                         w1_ref, b1_ref, w2_ref, b2_ref,
                         o_ref, attn_scr,
                         *, num_heads, head_dim):
    bb, S, D = x_ref.shape              # rows-per-block, seq, d_model (static)
    # (bb, S, D) -> (bb*S, D): S is a multiple of 8 so this reshape is a
    # layout no-op (no relayout copy).
    x = x_ref[...].reshape(bb * S, D)   # f32 activations for this block

    def mm(a_f32, w_ref, b_ref):
        # bf16 MXU matmul, f32 accumulation; bias add stays in f32.
        return jnp.dot(a_f32.astype(jnp.bfloat16), w_ref[...],
                       preferred_element_type=jnp.float32) + b_ref[...]

    # ---- Multi-head self-attention --------------------------------------
    # Fused QKV projection: one (bb*S, D) x (D, 3D) matmul.
    qkv = mm(x, wqkv_ref, bqkv_ref)                      # (bb*S, 3D) f32
    scale = 1.0 / (head_dim ** 0.5)
    q = qkv[:, :D] * scale                               # scale folded once
    k = qkv[:, D:2 * D]
    v = qkv[:, 2 * D:]

    # Per-(row, head) attention; bb and num_heads are small -> static unroll.
    for r in range(bb):
        mask_add = mask_ref[r]                           # (1, S) additive mask
        rows = slice(r * S, (r + 1) * S)
        for h in range(num_heads):
            cols = slice(h * head_dim, (h + 1) * head_dim)
            qh = q[rows, cols].astype(jnp.bfloat16)
            kh = k[rows, cols].astype(jnp.bfloat16)
            vh = v[rows, cols].astype(jnp.bfloat16)
            # scores: contract head dim of q and k -> (S, S), f32 accumulation.
            s = jax.lax.dot_general(qh, kh, (((1,), (1,)), ((), ())),
                                    preferred_element_type=jnp.float32)
            s = s + mask_add                             # mask keys
            s = s - jnp.max(s, axis=-1, keepdims=True)
            e = jnp.exp(s)
            inv = pl.reciprocal(jnp.sum(e, axis=-1, keepdims=True), approx=True)
            p = e * inv
            # Write the head output straight into the scratch slab at its
            # static lane offset (no jnp.concatenate relayout).
            attn_scr[pl.ds(r * S, S), pl.ds(h * head_dim, head_dim)] = jnp.dot(
                p.astype(jnp.bfloat16), vh, preferred_element_type=jnp.float32)

    attn = mm(attn_scr[...], wo_ref, bo_ref)             # output projection

    # TODO(synk): dropout>0 would need pltpu.prng_* in-kernel; p=0.0 here so
    # Dropout is the identity and is omitted.
    x1 = _layer_norm(x + attn)

    # ---- Feed-forward block ----------------------------------------------
    h1 = jnp.maximum(mm(x1, w1_ref, b1_ref), 0.0)        # ReLU in f32
    ff = mm(h1, w2_ref, b2_ref)

    out = _layer_norm(x1 + ff)
    o_ref[...] = out.reshape(bb, S, D).astype(o_ref.dtype)


def prepare_params(params):
    """One-time weight prep: fuse QKV and cast weights to bf16 for the MXU."""
    wqkv = jnp.concatenate([params["wq"], params["wk"], params["wv"]],
                           axis=1).astype(jnp.bfloat16)            # (D, 3D)
    bqkv = jnp.concatenate([params["bq"], params["bk"], params["bv"]],
                           axis=1)                                  # (1, 3D) f32
    return dict(
        wqkv=wqkv, bqkv=bqkv,
        wo=params["wo"].astype(jnp.bfloat16), bo=params["bo"],
        w1=params["w1"].astype(jnp.bfloat16), b1=params["b1"],
        w2=params["w2"].astype(jnp.bfloat16), b2=params["b2"],
    )


def transformer_encoder_layer(x, key_padding_mask, prepared, *, num_heads,
                              batch_blocks=None):
    """x: (B, S, D) f32 (batch_first).  key_padding_mask: (B, S) bool, True=pad.

    `prepared` comes from prepare_params()."""
    B, S, D = x.shape
    F = prepared["w1"].shape[1]
    assert D % num_heads == 0
    head_dim = D // num_heads

    # Batch grouping: at most 2 grid steps (keeps both v7x TensorCores busy
    # via the "parallel" axis, while v5e/v6e see a merged-M slab and few
    # fixed-overhead grid steps).
    if batch_blocks is None:
        batch_blocks = 2 if (B >= 2 and B % 2 == 0) else 1
    assert B % batch_blocks == 0
    bb = B // batch_blocks

    # Additive key-padding mask, shaped (B, 1, S) so the block's last two dims
    # equal the full array dims.
    mask_add = jnp.where(key_padding_mask, jnp.float32(-1e30),
                         jnp.float32(0.0)).reshape(B, 1, S)

    kernel = functools.partial(encoder_layer_kernel,
                               num_heads=num_heads, head_dim=head_dim)

    # Per-batch-block specs for activations; full-array, constant-index blocks
    # for weights/biases (DMA'd once, VMEM-resident across the grid).
    row3 = lambda shape: pl.BlockSpec(shape, lambda b: (b, 0, 0))
    full = lambda shape: pl.BlockSpec(shape, lambda b: (0,) * len(shape))

    flops = 2 * B * S * D * (4 * D + 2 * S + 2 * F)
    transcendentals = B * num_heads * S * (S + 1) + 2 * B * S
    bytes_accessed = (2 * B * S * D * 4                 # x in + out (f32)
                      + 2 * (4 * D * D + 2 * D * F)     # bf16 weights
                      + 4 * (5 * D + F)                 # f32 biases
                      + B * S * 4)                      # mask

    return pl.pallas_call(
        kernel,
        out_shape=jax.ShapeDtypeStruct((B, S, D), jnp.float32),
        grid=(batch_blocks,),
        in_specs=[
            row3((bb, S, D)),                    # x
            row3((bb, 1, S)),                    # additive key-padding mask
            full((D, 3 * D)), full((1, 3 * D)),  # fused wqkv, bqkv
            full((D, D)), full((1, D)),          # wo, bo
            full((D, F)), full((1, F)),          # w1, b1
            full((F, D)), full((1, D)),          # w2, b2
        ],
        out_specs=row3((bb, S, D)),
        scratch_shapes=[pltpu.VMEM((bb * S, D), jnp.float32)],  # head outputs
        compiler_params=pltpu.CompilerParams(
            dimension_semantics=("parallel",)),
        cost_estimate=pl.CostEstimate(flops=flops,
                                      transcendentals=transcendentals,
                                      bytes_accessed=bytes_accessed),
    )(x, mask_add,
      prepared["wqkv"], prepared["bqkv"],
      prepared["wo"], prepared["bo"],
      prepared["w1"], prepared["b1"],
      prepared["w2"], prepared["b2"])


def init_params(key, d_model, dim_ff):
    """Weights stored pre-transposed as (in_features, out_features)."""
    ks = jax.random.split(key, 12)

    def linear(kw, kb, fan_in, fan_out):
        bound = 1.0 / (fan_in ** 0.5)
        w = jax.random.uniform(kw, (fan_in, fan_out), jnp.float32, -bound, bound)
        b = jax.random.uniform(kb, (1, fan_out), jnp.float32, -bound, bound)
        return w, b

    wq, bq = linear(ks[0], ks[1], d_model, d_model)
    wk, bk = linear(ks[2], ks[3], d_model, d_model)
    wv, bv = linear(ks[4], ks[5], d_model, d_model)
    wo, bo = linear(ks[6], ks[7], d_model, d_model)
    w1, b1 = linear(ks[8], ks[9], d_model, dim_ff)
    w2, b2 = linear(ks[10], ks[11], dim_ff, d_model)
    return dict(wq=wq, bq=bq, wk=wk, bk=bk, wv=wv, bv=bv, wo=wo, bo=bo,
                w1=w1, b1=b1, w2=w2, b2=b2)


def reference(x, key_padding_mask, params, *, num_heads,
              matmul_dtype=jnp.bfloat16):
    """Pure-JAX reference of the torch forward (matmul_dtype controls whether
    matmul inputs are bf16, mirroring the kernel, or full f32)."""
    B, S, D = x.shape
    Dh = D // num_heads
    scale = 1.0 / (Dh ** 0.5)

    def mm(a, w, b):
        return jnp.dot(a.astype(matmul_dtype), w.astype(matmul_dtype),
                       preferred_element_type=jnp.float32) + b

    q = (mm(x, params["wq"], params["bq"]) * scale).reshape(B, S, num_heads, Dh)
    k = mm(x, params["wk"], params["bk"]).reshape(B, S, num_heads, Dh)
    v = mm(x, params["wv"], params["bv"]).reshape(B, S, num_heads, Dh)
    scores = jnp.einsum("bqhd,bkhd->bhqk",
                        q.astype(matmul_dtype), k.astype(matmul_dtype),
                        preferred_element_type=jnp.float32)
    scores = scores + jnp.where(key_padding_mask, -1e30, 0.0)[:, None, None, :]
    p = jax.nn.softmax(scores, axis=-1)
    attn = jnp.einsum("bhqk,bkhd->bqhd",
                      p.astype(matmul_dtype), v.astype(matmul_dtype),
                      preferred_element_type=jnp.float32).reshape(B, S, D)
    attn = mm(attn, params["wo"], params["bo"])
    x1 = _layer_norm(x + attn)
    h = jnp.maximum(mm(x1, params["w1"], params["b1"]), 0.0)
    ff = mm(h, params["w2"], params["b2"])
    return _layer_norm(x1 + ff)


if __name__ == "__main__":
    # Module config: input_size=128, num_heads=4, dim_feedforward=256,
    # batch_first=True, dropout=0.0, activation=relu.
    B, S, D = 2, 16, 128
    NUM_HEADS, DIM_FF = 4, 256

    key = jax.random.PRNGKey(0)
    kx, kp = jax.random.split(key)
    x = jax.random.normal(kx, (B, S, D), jnp.float32)
    params = init_params(kp, D, DIM_FF)
    prepared = prepare_params(params)   # one-time fused/bf16 weight prep

    # key_padding_mask: True = ignore that key (torch semantics).
    key_padding_mask = jnp.zeros((B, S), jnp.bool_).at[1, S - 3:].set(True)

    out = transformer_encoder_layer(x, key_padding_mask, prepared,
                                    num_heads=NUM_HEADS)
    out = jax.block_until_ready(out)
    assert out.shape == (B, S, D), out.shape

    # Reference with matching bf16-matmul numerics -> tight tolerance
    # (only difference: approx reciprocal in the kernel softmax).
    ref_bf16 = reference(x, key_padding_mask, params, num_heads=NUM_HEADS,
                         matmul_dtype=jnp.bfloat16)
    assert jnp.allclose(out, ref_bf16, atol=3e-3, rtol=3e-3), \
        float(jnp.max(jnp.abs(out - ref_bf16)))

    # Full-f32 torch-semantics reference (loose tol: bf16 MXU inputs vs f32).
    ref_f32 = reference(x, key_padding_mask, params, num_heads=NUM_HEADS,
                        matmul_dtype=jnp.float32)
    assert jnp.allclose(out, ref_f32, atol=1e-1, rtol=1e-1), \
        float(jnp.max(jnp.abs(out - ref_f32)))

    print("KERNEL_OK")
</pallas_src>

<mosaic_0001>
module attributes {stable_mosaic.version = 11 : i64} {
  func.func @encoder_layer_kernel(%arg0: i32, %arg1: memref<1x16x128xf32, #tpu.memory_space<vmem>>, %arg2: memref<1x1x16xf32, #tpu.memory_space<vmem>>, %arg3: memref<128x384xbf16, #tpu.memory_space<vmem>>, %arg4: memref<1x384xf32, #tpu.memory_space<vmem>>, %arg5: memref<128x128xbf16, #tpu.memory_space<vmem>>, %arg6: memref<1x128xf32, #tpu.memory_space<vmem>>, %arg7: memref<128x256xbf16, #tpu.memory_space<vmem>>, %arg8: memref<1x256xf32, #tpu.memory_space<vmem>>, %arg9: memref<256x128xbf16, #tpu.memory_space<vmem>>, %arg10: memref<1x128xf32, #tpu.memory_space<vmem>>, %arg11: memref<1x16x128xf32, #tpu.memory_space<vmem>>, %arg12: memref<16x128xf32, #tpu.memory_space<vmem>>) attributes {dimension_semantics = [#tpu.dimension_semantics<parallel>], iteration_bounds = array<i64: 2>, scalar_prefetch = 0 : i64, scratch_operands = 1 : i64, tpu.core_type = #tpu.core_type<tc>, window_params = [{transform_indices = @transform_0, window_bounds = array<i64: 1, 16, 128>}, {transform_indices = @transform_1, window_bounds = array<i64: 1, 1, 16>}, {pipeline_mode = #tpu.pipeline_mode<synchronous>, transform_indices = @transform_2, window_bounds = array<i64: 128, 384>}, {pipeline_mode = #tpu.pipeline_mode<synchronous>, transform_indices = @transform_3, window_bounds = array<i64: 1, 384>}, {pipeline_mode = #tpu.pipeline_mode<synchronous>, transform_indices = @transform_4, window_bounds = array<i64: 128, 128>}, {pipeline_mode = #tpu.pipeline_mode<synchronous>, transform_indices = @transform_5, window_bounds = array<i64: 1, 128>}, {pipeline_mode = #tpu.pipeline_mode<synchronous>, transform_indices = @transform_6, window_bounds = array<i64: 128, 256>}, {pipeline_mode = #tpu.pipeline_mode<synchronous>, transform_indices = @transform_7, window_bounds = array<i64: 1, 256>}, {pipeline_mode = #tpu.pipeline_mode<synchronous>, transform_indices = @transform_8, window_bounds = array<i64: 256, 128>}, {pipeline_mode = #tpu.pipeline_mode<synchronous>, transform_indices = @transform_9, window_bounds = array<i64: 1, 128>}, {transform_indices = @transform_10, window_bounds = array<i64: 1, 16, 128>}]} {
    %c0 = arith.constant 0 : index
    %c0_0 = arith.constant 0 : index
    %c0_1 = arith.constant 0 : index
    %0 = vector.load %arg1[%c0, %c0_0, %c0_1] : memref<1x16x128xf32, #tpu.memory_space<vmem>>, vector<1x16x128xf32>
    %1 = vector.shape_cast %0 : vector<1x16x128xf32> to vector<16x128xf32>
    %2 = arith.truncf %1 : vector<16x128xf32> to vector<16x128xbf16>
    %c0_2 = arith.constant 0 : index
    %c0_3 = arith.constant 0 : index
    %3 = vector.load %arg3[%c0_2, %c0_3] : memref<128x384xbf16, #tpu.memory_space<vmem>>, vector<128x384xbf16>
    %cst = arith.constant dense<0.000000e+00> : vector<16x384xf32>
    %4 = tpu.matmul %2, %3, %cst {dimension_numbers = #tpu.dot_dimension_numbers<[1], [0], [0], [1], [0, 0, 1, 1], [], []>} : vector<16x128xbf16>, vector<128x384xbf16>, vector<16x384xf32> -> vector<16x384xf32>
    %c0_4 = arith.constant 0 : index
    %c0_5 = arith.constant 0 : index
    %5 = vector.load %arg4[%c0_4, %c0_5] : memref<1x384xf32, #tpu.memory_space<vmem>>, vector<1x384xf32>
    %6 = vector.broadcast %5 : vector<1x384xf32> to vector<16x384xf32>
    %7 = arith.addf %4, %6 : vector<16x384xf32>
    %8 = vector.extract_strided_slice %7 {offsets = [0, 0], sizes = [16, 128], strides = [1, 1]} : vector<16x384xf32> to vector<16x128xf32>
    %cst_6 = arith.constant 0.176776692 : f32
    %9 = vector.broadcast %cst_6 : f32 to vector<16x128xf32>
    %10 = arith.mulf %8, %9 : vector<16x128xf32>
    %11 = vector.extract_strided_slice %7 {offsets = [0, 128], sizes = [16, 128], strides = [1, 1]} : vector<16x384xf32> to vector<16x128xf32>
    %12 = vector.extract_strided_slice %7 {offsets = [0, 256], sizes = [16, 128], strides = [1, 1]} : vector<16x384xf32> to vector<16x128xf32>
    %c0_7 = arith.constant 0 : index
    %c0_8 = arith.constant 0 : index
    %c0_9 = arith.constant 0 : index
    %13 = vector.load %arg2[%c0_7, %c0_8, %c0_9] : memref<1x1x16xf32, #tpu.memory_space<vmem>>, vector<1x1x16xf32>
    %14 = vector.shape_cast %13 : vector<1x1x16xf32> to vector<1x16xf32>
    %15 = vector.extract_strided_slice %10 {offsets = [0, 0], sizes = [16, 32], strides = [1, 1]} : vector<16x128xf32> to vector<16x32xf32>
    %16 = arith.truncf %15 : vector<16x32xf32> to vector<16x32xbf16>
    %17 = vector.extract_strided_slice %11 {offsets = [0, 0], sizes = [16, 32], strides = [1, 1]} : vector<16x128xf32> to vector<16x32xf32>
    %18 = arith.truncf %17 : vector<16x32xf32> to vector<16x32xbf16>
    %19 = vector.extract_strided_slice %12 {offsets = [0, 0], sizes = [16, 32], strides = [1, 1]} : vector<16x128xf32> to vector<16x32xf32>
    %20 = arith.truncf %19 : vector<16x32xf32> to vector<16x32xbf16>
    %cst_10 = arith.constant dense<0.000000e+00> : vector<16x16xf32>
    %21 = tpu.matmul %16, %18, %cst_10 {dimension_numbers = #tpu.dot_dimension_numbers<[1], [1], [0], [0], [0, 0, 1, 0], [], []>} : vector<16x32xbf16>, vector<16x32xbf16>, vector<16x16xf32> -> vector<16x16xf32>
    %22 = vector.broadcast %14 : vector<1x16xf32> to vector<16x16xf32>
    %23 = arith.addf %21, %22 : vector<16x16xf32>
    %cst_11 = arith.constant dense<0xFF800000> : vector<16xf32>
    %24 = vector.multi_reduction <maximumf>, %23, %cst_11 [1] : vector<16x16xf32> to vector<16xf32>
    %25 = vector.shape_cast %24 : vector<16xf32> to vector<16x1xf32>
    %26 = vector.broadcast %25 : vector<16x1xf32> to vector<16x16xf32>
    %27 = arith.subf %23, %26 : vector<16x16xf32>
    %28 = math.exp %27 : vector<16x16xf32>
    %cst_12 = arith.constant dense<0.000000e+00> : vector<16xf32>
    %29 = vector.multi_reduction <add>, %28, %cst_12 [1] : vector<16x16xf32> to vector<16xf32>
    %30 = vector.shape_cast %29 : vector<16xf32> to vector<16x1xf32>
    %31 = tpu.reciprocal %30 {approx = true} : vector<16x1xf32> -> vector<16x1xf32>
    %32 = vector.broadcast %31 : vector<16x1xf32> to vector<16x16xf32>
    %33 = arith.mulf %28, %32 : vector<16x16xf32>
    %34 = arith.truncf %33 : vector<16x16xf32> to vector<16x16xbf16>
    %cst_13 = arith.constant dense<0.000000e+00> : vector<16x32xf32>
    %35 = tpu.matmul %34, %20, %cst_13 {dimension_numbers = #tpu.dot_dimension_numbers<[1], [0], [0], [1], [0, 0, 1, 1], [], []>} : vector<16x16xbf16>, vector<16x32xbf16>, vector<16x32xf32> -> vector<16x32xf32>
    %c0_14 = arith.constant 0 : index
    %c0_15 = arith.constant 0 : index
    %36 = vector.load %arg12[%c0_14, %c0_15] : memref<16x128xf32, #tpu.memory_space<vmem>>, vector<16x32xf32>
    tpu.vector_store %arg12[%c0_14, %c0_15], %35 {strides = array<i32>} : memref<16x128xf32, #tpu.memory_space<vmem>>, vector<16x32xf32>,
    %37 = vector.extract_strided_slice %10 {offsets = [0, 32], sizes = [16, 32], strides = [1, 1]} : vector<16x128xf32> to vector<16x32xf32>
    %38 = arith.truncf %37 : vector<16x32xf32> to vector<16x32xbf16>
    %39 = vector.extract_strided_slice %11 {offsets = [0, 32], sizes = [16, 32], strides = [1, 1]} : vector<16x128xf32> to vector<16x32xf32>
    %40 = arith.truncf %39 : vector<16x32xf32> to vector<16x32xbf16>
    %41 = vector.extract_strided_slice %12 {offsets = [0, 32], sizes = [16, 32], strides = [1, 1]} : vector<16x128xf32> to vector<16x32xf32>
    %42 = arith.truncf %41 : vector<16x32xf32> to vector<16x32xbf16>
    %cst_16 = arith.constant dense<0.000000e+00> : vector<16x16xf32>
    %43 = tpu.matmul %38, %40, %cst_16 {dimension_numbers = #tpu.dot_dimension_numbers<[1], [1], [0], [0], [0, 0, 1, 0], [], []>} : vector<16x32xbf16>, vector<16x32xbf16>, vector<16x16xf32> -> vector<16x16xf32>
    %44 = vector.broadcast %14 : vector<1x16xf32> to vector<16x16xf32>
    %45 = arith.addf %43, %44 : vector<16x16xf32>
    %cst_17 = arith.constant dense<0xFF800000> : vector<16xf32>
    %46 = vector.multi_reduction <maximumf>, %45, %cst_17 [1] : vector<16x16xf32> to vector<16xf32>
    %47 = vector.shape_cast %46 : vector<16xf32> to vector<16x1xf32>
    %48 = vector.broadcast %47 : vector<16x1xf32> to vector<16x16xf32>
    %49 = arith.subf %45, %48 : vector<16x16xf32>
    %50 = math.exp %49 : vector<16x16xf32>
    %cst_18 = arith.constant dense<0.000000e+00> : vector<16xf32>
    %51 = vector.multi_reduction <add>, %50, %cst_18 [1] : vector<16x16xf32> to vector<16xf32>
    %52 = vector.shape_cast %51 : vector<16xf32> to vector<16x1xf32>
    %53 = tpu.reciprocal %52 {approx = true} : vector<16x1xf32> -> vector<16x1xf32>
    %54 = vector.broadcast %53 : vector<16x1xf32> to vector<16x16xf32>
    %55 = arith.mulf %50, %54 : vector<16x16xf32>
    %56 = arith.truncf %55 : vector<16x16xf32> to vector<16x16xbf16>
    %cst_19 = arith.constant dense<0.000000e+00> : vector<16x32xf32>
    %57 = tpu.matmul %56, %42, %cst_19 {dimension_numbers = #tpu.dot_dimension_numbers<[1], [0], [0], [1], [0, 0, 1, 1], [], []>} : vector<16x16xbf16>, vector<16x32xbf16>, vector<16x32xf32> -> vector<16x32xf32>
    %c0_20 = arith.constant 0 : index
    %c32 = arith.constant 32 : index
    %58 = vector.load %arg12[%c0_20, %c32] : memref<16x128xf32, #tpu.memory_space<vmem>>, vector<16x32xf32>
    tpu.vector_store %arg12[%c0_20, %c32], %57 {strides = array<i32>} : memref<16x128xf32, #tpu.memory_space<vmem>>, vector<16x32xf32>,
    %59 = vector.extract_strided_slice %10 {offsets = [0, 64], sizes = [16, 32], strides = [1, 1]} : vector<16x128xf32> to vector<16x32xf32>
    %60 = arith.truncf %59 : vector<16x32xf32> to vector<16x32xbf16>
    %61 = vector.extract_strided_slice %11 {offsets = [0, 64], sizes = [16, 32], strides = [1, 1]} : vector<16x128xf32> to vector<16x32xf32>
    %62 = arith.truncf %61 : vector<16x32xf32> to vector<16x32xbf16>
    %63 = vector.extract_strided_slice %12 {offsets = [0, 64], sizes = [16, 32], strides = [1, 1]} : vector<16x128xf32> to vector<16x32xf32>
    %64 = arith.truncf %63 : vector<16x32xf32> to vector<16x32xbf16>
    %cst_21 = arith.constant dense<0.000000e+00> : vector<16x16xf32>
    %65 = tpu.matmul %60, %62, %cst_21 {dimension_numbers = #tpu.dot_dimension_numbers<[1], [1], [0], [0], [0, 0, 1, 0], [], []>} : vector<16x32xbf16>, vector<16x32xbf16>, vector<16x16xf32> -> vector<16x16xf32>
    %66 = vector.broadcast %14 : vector<1x16xf32> to vector<16x16xf32>
    %67 = arith.addf %65, %66 : vector<16x16xf32>
    %cst_22 = arith.constant dense<0xFF800000> : vector<16xf32>
    %68 = vector.multi_reduction <maximumf>, %67, %cst_22 [1] : vector<16x16xf32> to vector<16xf32>
    %69 = vector.shape_cast %68 : vector<16xf32> to vector<16x1xf32>
    %70 = vector.broadcast %69 : vector<16x1xf32> to vector<16x16xf32>
    %71 = arith.subf %67, %70 : vector<16x16xf32>
    %72 = math.exp %71 : vector<16x16xf32>
    %cst_23 = arith.constant dense<0.000000e+00> : vector<16xf32>
    %73 = vector.multi_reduction <add>, %72, %cst_23 [1] : vector<16x16xf32> to vector<16xf32>
    %74 = vector.shape_cast %73 : vector<16xf32> to vector<16x1xf32>
    %75 = tpu.reciprocal %74 {approx = true} : vector<16x1xf32> -> vector<16x1xf32>
    %76 = vector.broadcast %75 : vector<16x1xf32> to vector<16x16xf32>
    %77 = arith.mulf %72, %76 : vector<16x16xf32>
    %78 = arith.truncf %77 : vector<16x16xf32> to vector<16x16xbf16>
    %cst_24 = arith.constant dense<0.000000e+00> : vector<16x32xf32>
    %79 = tpu.matmul %78, %64, %cst_24 {dimension_numbers = #tpu.dot_dimension_numbers<[1], [0], [0], [1], [0, 0, 1, 1], [], []>} : vector<16x16xbf16>, vector<16x32xbf16>, vector<16x32xf32> -> vector<16x32xf32>
    %c0_25 = arith.constant 0 : index
    %c64 = arith.constant 64 : index
    %80 = vector.load %arg12[%c0_25, %c64] : memref<16x128xf32, #tpu.memory_space<vmem>>, vector<16x32xf32>
    tpu.vector_store %arg12[%c0_25, %c64], %79 {strides = array<i32>} : memref<16x128xf32, #tpu.memory_space<vmem>>, vector<16x32xf32>,
    %81 = vector.extract_strided_slice %10 {offsets = [0, 96], sizes = [16, 32], strides = [1, 1]} : vector<16x128xf32> to vector<16x32xf32>
    %82 = arith.truncf %81 : vector<16x32xf32> to vector<16x32xbf16>
    %83 = vector.extract_strided_slice %11 {offsets = [0, 96], sizes = [16, 32], strides = [1, 1]} : vector<16x128xf32> to vector<16x32xf32>
    %84 = arith.truncf %83 : vector<16x32xf32> to vector<16x32xbf16>
    %85 = vector.extract_strided_slice %12 {offsets = [0, 96], sizes = [16, 32], strides = [1, 1]} : vector<16x128xf32> to vector<16x32xf32>
    %86 = arith.truncf %85 : vector<16x32xf32> to vector<16x32xbf16>
    %cst_26 = arith.constant dense<0.000000e+00> : vector<16x16xf32>
    %87 = tpu.matmul %82, %84, %cst_26 {dimension_numbers = #tpu.dot_dimension_numbers<[1], [1], [0], [0], [0, 0, 1, 0], [], []>} : vector<16x32xbf16>, vector<16x32xbf16>, vector<16x16xf32> -> vector<16x16xf32>
    %88 = vector.broadcast %14 : vector<1x16xf32> to vector<16x16xf32>
    %89 = arith.addf %87, %88 : vector<16x16xf32>
    %cst_27 = arith.constant dense<0xFF800000> : vector<16xf32>
    %90 = vector.multi_reduction <maximumf>, %89, %cst_27 [1] : vector<16x16xf32> to vector<16xf32>
    %91 = vector.shape_cast %90 : vector<16xf32> to vector<16x1xf32>
    %92 = vector.broadcast %91 : vector<16x1xf32> to vector<16x16xf32>
    %93 = arith.subf %89, %92 : vector<16x16xf32>
    %94 = math.exp %93 : vector<16x16xf32>
    %cst_28 = arith.constant dense<0.000000e+00> : vector<16xf32>
    %95 = vector.multi_reduction <add>, %94, %cst_28 [1] : vector<16x16xf32> to vector<16xf32>
    %96 = vector.shape_cast %95 : vector<16xf32> to vector<16x1xf32>
    %97 = tpu.reciprocal %96 {approx = true} : vector<16x1xf32> -> vector<16x1xf32>
    %98 = vector.broadcast %97 : vector<16x1xf32> to vector<16x16xf32>
    %99 = arith.mulf %94, %98 : vector<16x16xf32>
    %100 = arith.truncf %99 : vector<16x16xf32> to vector<16x16xbf16>
    %cst_29 = arith.constant dense<0.000000e+00> : vector<16x32xf32>
    %101 = tpu.matmul %100, %86, %cst_29 {dimension_numbers = #tpu.dot_dimension_numbers<[1], [0], [0], [1], [0, 0, 1, 1], [], []>} : vector<16x16xbf16>, vector<16x32xbf16>, vector<16x32xf32> -> vector<16x32xf32>
    %c0_30 = arith.constant 0 : index
    %c96 = arith.constant 96 : index
    %102 = vector.load %arg12[%c0_30, %c96] : memref<16x128xf32, #tpu.memory_space<vmem>>, vector<16x32xf32>
    tpu.vector_store %arg12[%c0_30, %c96], %101 {strides = array<i32>} : memref<16x128xf32, #tpu.memory_space<vmem>>, vector<16x32xf32>,
    %c0_31 = arith.constant 0 : index
    %c0_32 = arith.constant 0 : index
    %103 = vector.load %arg12[%c0_31, %c0_32] : memref<16x128xf32, #tpu.memory_space<vmem>>, vector<16x128xf32>
    %104 = arith.truncf %103 : vector<16x128xf32> to vector<16x128xbf16>
    %c0_33 = arith.constant 0 : index
    %c0_34 = arith.constant 0 : index
    %105 = vector.load %arg5[%c0_33, %c0_34] : memref<128x128xbf16, #tpu.memory_space<vmem>>, vector<128x128xbf16>
    %cst_35 = arith.constant dense<0.000000e+00> : vector<16x128xf32>
    %106 = tpu.matmul %104, %105, %cst_35 {dimension_numbers = #tpu.dot_dimension_numbers<[1], [0], [0], [1], [0, 0, 1, 1], [], []>} : vector<16x128xbf16>, vector<128x128xbf16>, vector<16x128xf32> -> vector<16x128xf32>
    %c0_36 = arith.constant 0 : index
    %c0_37 = arith.constant 0 : index
    %107 = vector.load %arg6[%c0_36, %c0_37] : memref<1x128xf32, #tpu.memory_space<vmem>>, vector<1x128xf32>
    %108 = vector.broadcast %107 : vector<1x128xf32> to vector<16x128xf32>
    %109 = arith.addf %106, %108 : vector<16x128xf32>
    %110 = arith.addf %1, %109 : vector<16x128xf32>
    %cst_38 = arith.constant dense<0.000000e+00> : vector<16xf32>
    %111 = vector.multi_reduction <add>, %110, %cst_38 [1] : vector<16x128xf32> to vector<16xf32>
    %112 = vector.shape_cast %111 : vector<16xf32> to vector<16x1xf32>
    %cst_39 = arith.constant 1.280000e+02 : f32
    %113 = vector.broadcast %cst_39 : f32 to vector<16x1xf32>
    %114 = arith.divf %112, %113 : vector<16x1xf32>
    %115 = vector.broadcast %114 : vector<16x1xf32> to vector<16x128xf32>
    %116 = arith.subf %110, %115 : vector<16x128xf32>
    %117 = arith.mulf %116, %116 : vector<16x128xf32>
    %cst_40 = arith.constant dense<0.000000e+00> : vector<16xf32>
    %118 = vector.multi_reduction <add>, %117, %cst_40 [1] : vector<16x128xf32> to vector<16xf32>
    %119 = vector.shape_cast %118 : vector<16xf32> to vector<16x1xf32>
    %cst_41 = arith.constant 1.280000e+02 : f32
    %120 = vector.broadcast %cst_41 : f32 to vector<16x1xf32>
    %121 = arith.divf %119, %120 : vector<16x1xf32>
    %cst_42 = arith.constant 9.99999974E-6 : f32
    %122 = vector.broadcast %cst_42 : f32 to vector<16x1xf32>
    %123 = arith.addf %121, %122 : vector<16x1xf32>
    %124 = math.rsqrt %123 : vector<16x1xf32>
    %125 = vector.broadcast %124 : vector<16x1xf32> to vector<16x128xf32>
    %126 = arith.mulf %116, %125 : vector<16x128xf32>
    %127 = arith.truncf %126 : vector<16x128xf32> to vector<16x128xbf16>
    %c0_43 = arith.constant 0 : index
    %c0_44 = arith.constant 0 : index
    %128 = vector.load %arg7[%c0_43, %c0_44] : memref<128x256xbf16, #tpu.memory_space<vmem>>, vector<128x256xbf16>
    %cst_45 = arith.constant dense<0.000000e+00> : vector<16x256xf32>
    %129 = tpu.matmul %127, %128, %cst_45 {dimension_numbers = #tpu.dot_dimension_numbers<[1], [0], [0], [1], [0, 0, 1, 1], [], []>} : vector<16x128xbf16>, vector<128x256xbf16>, vector<16x256xf32> -> vector<16x256xf32>
    %c0_46 = arith.constant 0 : index
    %c0_47 = arith.constant 0 : index
    %130 = vector.load %arg8[%c0_46, %c0_47] : memref<1x256xf32, #tpu.memory_space<vmem>>, vector<1x256xf32>
    %131 = vector.broadcast %130 : vector<1x256xf32> to vector<16x256xf32>
    %132 = arith.addf %129, %131 : vector<16x256xf32>
    %cst_48 = arith.constant 0.000000e+00 : f32
    %133 = vector.broadcast %cst_48 : f32 to vector<16x256xf32>
    %134 = arith.maximumf %132, %133 : vector<16x256xf32>
    %135 = arith.truncf %134 : vector<16x256xf32> to vector<16x256xbf16>
    %c0_49 = arith.constant 0 : index
    %c0_50 = arith.constant 0 : index
    %136 = vector.load %arg9[%c0_49, %c0_50] : memref<256x128xbf16, #tpu.memory_space<vmem>>, vector<256x128xbf16>
    %cst_51 = arith.constant dense<0.000000e+00> : vector<16x128xf32>
    %137 = tpu.matmul %135, %136, %cst_51 {dimension_numbers = #tpu.dot_dimension_numbers<[1], [0], [0], [1], [0, 0, 1, 1], [], []>} : vector<16x256xbf16>, vector<256x128xbf16>, vector<16x128xf32> -> vector<16x128xf32>
    %c0_52 = arith.constant 0 : index
    %c0_53 = arith.constant 0 : index
    %138 = vector.load %arg10[%c0_52, %c0_53] : memref<1x128xf32, #tpu.memory_space<vmem>>, vector<1x128xf32>
    %139 = vector.broadcast %138 : vector<1x128xf32> to vector<16x128xf32>
    %140 = arith.addf %137, %139 : vector<16x128xf32>
    %141 = arith.addf %126, %140 : vector<16x128xf32>
    %cst_54 = arith.constant dense<0.000000e+00> : vector<16xf32>
    %142 = vector.multi_reduction <add>, %141, %cst_54 [1] : vector<16x128xf32> to vector<16xf32>
    %143 = vector.shape_cast %142 : vector<16xf32> to vector<16x1xf32>
    %cst_55 = arith.constant 1.280000e+02 : f32
    %144 = vector.broadcast %cst_55 : f32 to vector<16x1xf32>
    %145 = arith.divf %143, %144 : vector<16x1xf32>
    %146 = vector.broadcast %145 : vector<16x1xf32> to vector<16x128xf32>
    %147 = arith.subf %141, %146 : vector<16x128xf32>
    %148 = arith.mulf %147, %147 : vector<16x128xf32>
    %cst_56 = arith.constant dense<0.000000e+00> : vector<16xf32>
    %149 = vector.multi_reduction <add>, %148, %cst_56 [1] : vector<16x128xf32> to vector<16xf32>
    %150 = vector.shape_cast %149 : vector<16xf32> to vector<16x1xf32>
    %cst_57 = arith.constant 1.280000e+02 : f32
    %151 = vector.broadcast %cst_57 : f32 to vector<16x1xf32>
    %152 = arith.divf %150, %151 : vector<16x1xf32>
    %cst_58 = arith.constant 9.99999974E-6 : f32
    %153 = vector.broadcast %cst_58 : f32 to vector<16x1xf32>
    %154 = arith.addf %152, %153 : vector<16x1xf32>
    %155 = math.rsqrt %154 : vector<16x1xf32>
    %156 = vector.broadcast %155 : vector<16x1xf32> to vector<16x128xf32>
    %157 = arith.mulf %147, %156 : vector<16x128xf32>
    %158 = vector.shape_cast %157 : vector<16x128xf32> to vector<1x16x128xf32>
    %c0_59 = arith.constant 0 : index
    %c0_60 = arith.constant 0 : index
    %c0_61 = arith.constant 0 : index
    %159 = vector.load %arg11[%c0_59, %c0_60, %c0_61] : memref<1x16x128xf32, #tpu.memory_space<vmem>>, vector<1x16x128xf32>
    tpu.vector_store %arg11[%c0_59, %c0_60, %c0_61], %158 {strides = array<i32>} : memref<1x16x128xf32, #tpu.memory_space<vmem>>, vector<1x16x128xf32>,
    return
  }
  func.func @transform_0(%arg0: i32) -> (i32, i32, i32) {
    %c0_i32 = arith.constant 0 : i32
    %c0_i32_0 = arith.constant 0 : i32
    %c0_i32_1 = arith.constant 0 : i32
    return %arg0, %c0_i32, %c0_i32_0 : i32, i32, i32
  }
  func.func @transform_1(%arg0: i32) -> (i32, i32, i32) {
    %c0_i32 = arith.constant 0 : i32
    %c0_i32_0 = arith.constant 0 : i32
    %c0_i32_1 = arith.constant 0 : i32
    return %arg0, %c0_i32, %c0_i32_0 : i32, i32, i32
  }
  func.func @transform_2(%arg0: i32) -> (i32, i32) {
    %c0_i32 = arith.constant 0 : i32
    %c0_i32_0 = arith.constant 0 : i32
    %c0_i32_1 = arith.constant 0 : i32
    return %c0_i32, %c0_i32_0 : i32, i32
  }
  func.func @transform_3(%arg0: i32) -> (i32, i32) {
    %c0_i32 = arith.constant 0 : i32
    %c0_i32_0 = arith.constant 0 : i32
    %c0_i32_1 = arith.constant 0 : i32
    return %c0_i32, %c0_i32_0 : i32, i32
  }
  func.func @transform_4(%arg0: i32) -> (i32, i32) {
    %c0_i32 = arith.constant 0 : i32
    %c0_i32_0 = arith.constant 0 : i32
    %c0_i32_1 = arith.constant 0 : i32
    return %c0_i32, %c0_i32_0 : i32, i32
  }
  func.func @transform_5(%arg0: i32) -> (i32, i32) {
    %c0_i32 = arith.constant 0 : i32
    %c0_i32_0 = arith.constant 0 : i32
    %c0_i32_1 = arith.constant 0 : i32
    return %c0_i32, %c0_i32_0 : i32, i32
  }
  func.func @transform_6(%arg0: i32) -> (i32, i32) {
    %c0_i32 = arith.constant 0 : i32
    %c0_i32_0 = arith.constant 0 : i32
    %c0_i32_1 = arith.constant 0 : i32
    return %c0_i32, %c0_i32_0 : i32, i32
  }
  func.func @transform_7(%arg0: i32) -> (i32, i32) {
    %c0_i32 = arith.constant 0 : i32
    %c0_i32_0 = arith.constant 0 : i32
    %c0_i32_1 = arith.constant 0 : i32
    return %c0_i32, %c0_i32_0 : i32, i32
  }
  func.func @transform_8(%arg0: i32) -> (i32, i32) {
    %c0_i32 = arith.constant 0 : i32
    %c0_i32_0 = arith.constant 0 : i32
    %c0_i32_1 = arith.constant 0 : i32
    return %c0_i32, %c0_i32_0 : i32, i32
  }
  func.func @transform_9(%arg0: i32) -> (i32, i32) {
    %c0_i32 = arith.constant 0 : i32
    %c0_i32_0 = arith.constant 0 : i32
    %c0_i32_1 = arith.constant 0 : i32
    return %c0_i32, %c0_i32_0 : i32, i32
  }
  func.func @transform_10(%arg0: i32) -> (i32, i32, i32) {
    %c0_i32 = arith.constant 0 : i32
    %c0_i32_0 = arith.constant 0 : i32
    %c0_i32_1 = arith.constant 0 : i32
    return %arg0, %c0_i32, %c0_i32_0 : i32, i32, i32
  }
}

</mosaic_0001>

<llo_original>
// kernel: tpu_custom_call.1
$region0: #{tpu_custom_call.1}
  #allocation0 [shape = 'u32[]', space=smem, size = 0x4, offset = 0x4, fixed_abs, tag = 'smem constant byte address 0x4 - core index']
  #allocation1 [shape = 'u32[144,128]{1,0:T(1,128)}', space=vmem, size = 0x12000, scoped, tag = 'internal scratch']
  #allocation2 [shape = 'f32[16,128]{1,0:T(8,128)}', space=vmem, size = 0x2000, scoped, tag = 'scratch operand']
  %s0 = inlined_call_operand.hbm [shape: f32[2,16,128], index: 0, kind: input, shape index: {}]
  %s1 = inlined_call_operand.hbm [shape: f32[2,1,16], index: 1, kind: input, shape index: {}]
  %s2 = inlined_call_operand.hbm [shape: bf16[128,384], index: 2, kind: input, shape index: {}]
  %s3 = inlined_call_operand.vmem [shape: f32[1,384], index: 3, kind: input, shape index: {}]
  %s4 = inlined_call_operand.hbm [shape: bf16[128,128], index: 4, kind: input, shape index: {}]
  %s5 = inlined_call_operand.vmem [shape: f32[1,128], index: 5, kind: input, shape index: {}]
  %s6 = inlined_call_operand.hbm [shape: bf16[128,256], index: 6, kind: input, shape index: {}]
  %s7 = inlined_call_operand.vmem [shape: f32[1,256], index: 7, kind: input, shape index: {}]
  %s8 = inlined_call_operand.hbm [shape: bf16[256,128], index: 8, kind: input, shape index: {}]
  %s9 = inlined_call_operand.vmem [shape: f32[1,128], index: 9, kind: input, shape index: {}]
  %s10 = inlined_call_operand.hbm [shape: f32[2,16,128], index: 10, kind: output, shape index: {}]
  %s11 = sld [smem:[#allocation0]]
  $region97: #{tpu_custom_call.1} parent=0
    _
  %s13 = ssub.s32 1, %s11
  %s14 = scalar_select 0, %s13, %s11
  $region1: #{tpu_custom_call.1} parent=0
    #allocation3 [shape = 'u8[16384]{0}', space=vmem, size = 0x4000, scoped, tag = 'input window, operand 0']
    #allocation4 [shape = 's32[2]{0}', space=sflag, size = 0x8, scoped, tag = 'scoped memory for tpu_custom_call.1']
    #allocation5 [shape = 's32[2]{0}', space=sflag, size = 0x8, scoped, tag = 'scoped memory for tpu_custom_call.1']
    #allocation6 [shape = 'u8[1024]{0}', space=vmem, size = 0x400, scoped, tag = 'input window, operand 1']
    #allocation7 [shape = 's32[2]{0}', space=sflag, size = 0x8, scoped, tag = 'scoped memory for tpu_custom_call.1']
    #allocation8 [shape = 'u8[98304]{0}', space=vmem, size = 0x18000, scoped, tag = 'input window, operand 2, single buffered']
    #allocation9 [shape = 'u8[32768]{0}', space=vmem, size = 0x8000, scoped, tag = 'input window, operand 4, single buffered']
    #allocation10 [shape = 's32[1]{0}', space=sflag, size = 0x4, scoped, tag = 'scoped memory for tpu_custom_call.1']
    #allocation11 [shape = 'u8[65536]{0}', space=vmem, size = 0x10000, scoped, tag = 'input window, operand 6, single buffered']
    #allocation12 [shape = 'u8[65536]{0}', space=vmem, size = 0x10000, scoped, tag = 'input window, operand 8, single buffered']
    #allocation13 [shape = 's32[1]{0}', space=sflag, size = 0x4, scoped, tag = 'scoped memory for tpu_custom_call.1']
    #allocation14 [shape = 'u8[16384]{0}', space=vmem, size = 0x4000, scoped, tag = 'output window, operand 0']
    %15 = vsyncpa [#allocation4], 0
    %s16 = scalar_lea.sflag [#allocation4], 1
    %17 = vsyncpa %s16, 0
    %18 = vsyncpa [#allocation7], 0
    %s19 = scalar_lea.sflag [#allocation7], 1
    %20 = vsyncpa %s19, 0
    %21 = vsyncpa [#allocation10], 0
    %22 = vsyncpa [#allocation13], 0
    %23 = vsyncpa [#allocation5], 0
    %s24 = scalar_lea.sflag [#allocation5], 1
    %25 = vsyncpa %s24, 0
    loop: start=0, step=1, limit=4
    $region2: #{tpu_custom_call.1} parent=1 // loop_pre_header
      _
    $region3: #{tpu_custom_call.1} parent=1 // loop_header
      %s27 = sphi 0, %s31
      %p28 = scmp.ge.s32.totalorder %s27, 4
      %s37 = sphi 0, %s39
      %s40 = sphi 0, %s37
      %s41 = sphi 0, %s40
      %s57 = sphi 0, %s41
      %s63 = sphi 0, %s65
      %s66 = sphi 0, %s63
      %s67 = sphi 0, %s66
      %s83 = sphi 0, %s67
      %s87 = sphi 0, %s87
      %s89 = sphi 0, %s87
      %s90 = sphi 0, %s89
      %s104 = sphi 0, %s90
      %s108 = sphi 0, %s108
      %s110 = sphi 0, %s108
      %s111 = sphi 0, %s110
      %s125 = sphi 0, %s111
      %s129 = sphi 0, %s129
      %s131 = sphi 0, %s129
      %s132 = sphi 0, %s131
      %s146 = sphi 0, %s132
      %s150 = sphi 0, %s150
      %s152 = sphi 0, %s150
      %s153 = sphi 0, %s152
      %s167 = sphi 0, %s153
      %s171 = sphi 0, %s171
      %s173 = sphi 0, %s171
      %s174 = sphi 0, %s173
      %s188 = sphi 0, %s174
      %s192 = sphi 0, %s192
      %s194 = sphi 0, %s192
      %s195 = sphi 0, %s194
      %s209 = sphi 0, %s195
      %s213 = sphi 0, %s213
      %s215 = sphi 0, %s213
      %s216 = sphi 0, %s215
      %s230 = sphi 0, %s216
      %s234 = sphi 0, %s234
      %s236 = sphi 0, %s234
      %s237 = sphi 0, %s236
      %s251 = sphi 0, %s237
      %s257 = sphi 0, %s259
      %s260 = sphi 0, %s257
      %s261 = sphi 0, %s260
      %s277 = sphi 0, %s261
    $region4: #{tpu_custom_call.1} parent=1 // loop_header_branch
      %30 = sbr.rel (%p28) target = $region8
    $region5: #{tpu_custom_call.1} parent=1 // loop_body
      %s32 = ssub.s32 %s27, 1
      %s33 = ssub.s32 %s27, 2
      %s34 = sadd.s32 %s27, 1
      %s35 = ssub.s32 %s27, %s34
      %p36 = scmp.eq.s32.totalorder %s35, 0
      %s38 = sadd.s32 %s37, 1
      %s39 = scalar_select %p36, %s37, %s38
      %p42 = pneg %p36
      %p43 = scmp.eq.s32.totalorder %s27, 1
      %p44 = por %p42, %p43
      %p45 = scmp.ne.s32.totalorder %s37, %s40
      %p46 = scmp.eq.s32.totalorder %s27, 0
      %p47 = por %p45, %p46
      %p48 = scmp.ne.s32.totalorder %s37, %s40
      %p49 = scmp.eq.s32.totalorder %s32, 1
      %p50 = por %p48, %p49
      %p51 = scmp.ne.s32.totalorder %s40, %s41
      %p52 = scmp.eq.s32.totalorder %s32, 0
      %p53 = por %p51, %p52
      %p54 = scmp.ne.s32.totalorder %s40, %s41
      %p55 = scmp.eq.s32.totalorder %s33, 1
      %p56 = por %p54, %p55
      %p58 = scmp.ne.s32.totalorder %s41, %s57
      %p59 = scmp.eq.s32.totalorder %s33, 0
      %p60 = por %p58, %p59
      %s61 = ssub.s32 %s27, %s34
      %p62 = scmp.eq.s32.totalorder %s61, 0
      %s64 = sadd.s32 %s63, 1
      %s65 = scalar_select %p62, %s63, %s64
      %p68 = pneg %p62
      %p69 = scmp.eq.s32.totalorder %s27, 1
      %p70 = por %p68, %p69
      %p71 = scmp.ne.s32.totalorder %s63, %s66
      %p72 = scmp.eq.s32.totalorder %s27, 0
      %p73 = por %p71, %p72
      %p74 = scmp.ne.s32.totalorder %s63, %s66
      %p75 = scmp.eq.s32.totalorder %s32, 1
      %p76 = por %p74, %p75
      %p77 = scmp.ne.s32.totalorder %s66, %s67
      %p78 = scmp.eq.s32.totalorder %s32, 0
      %p79 = por %p77, %p78
      %p80 = scmp.ne.s32.totalorder %s66, %s67
      %p81 = scmp.eq.s32.totalorder %s33, 1
      %p82 = por %p80, %p81
      %p84 = scmp.ne.s32.totalorder %s67, %s83
      %p85 = scmp.eq.s32.totalorder %s33, 0
      %p86 = por %p84, %p85
      %s88 = sadd.s32 %s87, 1
      %p91 = scmp.eq.s32.totalorder %s27, 1
      %p92 = scmp.ne.s32.totalorder %s87, %s89
      %p93 = scmp.eq.s32.totalorder %s27, 0
      %p94 = por %p92, %p93
      %p95 = scmp.ne.s32.totalorder %s87, %s89
      %p96 = scmp.eq.s32.totalorder %s32, 1
      %p97 = por %p95, %p96
      %p98 = scmp.ne.s32.totalorder %s89, %s90
      %p99 = scmp.eq.s32.totalorder %s32, 0
      %p100 = por %p98, %p99
      %p101 = scmp.ne.s32.totalorder %s89, %s90
      %p102 = scmp.eq.s32.totalorder %s33, 1
      %p103 = por %p101, %p102
      %p105 = scmp.ne.s32.totalorder %s90, %s104
      %p106 = scmp.eq.s32.totalorder %s33, 0
      %p107 = por %p105, %p106
      %s109 = sadd.s32 %s108, 1
      %p112 = scmp.eq.s32.totalorder %s27, 1
      %p113 = scmp.ne.s32.totalorder %s108, %s110
      %p114 = scmp.eq.s32.totalorder %s27, 0
      %p115 = por %p113, %p114
      %p116 = scmp.ne.s32.totalorder %s108, %s110
      %p117 = scmp.eq.s32.totalorder %s32, 1
      %p118 = por %p116, %p117
      %p119 = scmp.ne.s32.totalorder %s110, %s111
      %p120 = scmp.eq.s32.totalorder %s32, 0
      %p121 = por %p119, %p120
      %p122 = scmp.ne.s32.totalorder %s110, %s111
      %p123 = scmp.eq.s32.totalorder %s33, 1
      %p124 = por %p122, %p123
      %p126 = scmp.ne.s32.totalorder %s111, %s125
      %p127 = scmp.eq.s32.totalorder %s33, 0
      %p128 = por %p126, %p127
      %s130 = sadd.s32 %s129, 1
      %p133 = scmp.eq.s32.totalorder %s27, 1
      %p134 = scmp.ne.s32.totalorder %s129, %s131
      %p135 = scmp.eq.s32.totalorder %s27, 0
      %p136 = por %p134, %p135
      %p137 = scmp.ne.s32.totalorder %s129, %s131
      %p138 = scmp.eq.s32.totalorder %s32, 1
      %p139 = por %p137, %p138
      %p140 = scmp.ne.s32.totalorder %s131, %s132
      %p141 = scmp.eq.s32.totalorder %s32, 0
      %p142 = por %p140, %p141
      %p143 = scmp.ne.s32.totalorder %s131, %s132
      %p144 = scmp.eq.s32.totalorder %s33, 1
      %p145 = por %p143, %p144
      %p147 = scmp.ne.s32.totalorder %s132, %s146
      %p148 = scmp.eq.s32.totalorder %s33, 0
      %p149 = por %p147, %p148
      %s151 = sadd.s32 %s150, 1
      %p154 = scmp.eq.s32.totalorder %s27, 1
      %p155 = scmp.ne.s32.totalorder %s150, %s152
      %p156 = scmp.eq.s32.totalorder %s27, 0
      %p157 = por %p155, %p156
      %p158 = scmp.ne.s32.totalorder %s150, %s152
      %p159 = scmp.eq.s32.totalorder %s32, 1
      %p160 = por %p158, %p159
      %p161 = scmp.ne.s32.totalorder %s152, %s153
      %p162 = scmp.eq.s32.totalorder %s32, 0
      %p163 = por %p161, %p162
      %p164 = scmp.ne.s32.totalorder %s152, %s153
      %p165 = scmp.eq.s32.totalorder %s33, 1
      %p166 = por %p164, %p165
      %p168 = scmp.ne.s32.totalorder %s153, %s167
      %p169 = scmp.eq.s32.totalorder %s33, 0
      %p170 = por %p168, %p169
      %s172 = sadd.s32 %s171, 1
      %p175 = scmp.eq.s32.totalorder %s27, 1
      %p176 = scmp.ne.s32.totalorder %s171, %s173
      %p177 = scmp.eq.s32.totalorder %s27, 0
      %p178 = por %p176, %p177
      %p179 = scmp.ne.s32.totalorder %s171, %s173
      %p180 = scmp.eq.s32.totalorder %s32, 1
      %p181 = por %p179, %p180
      %p182 = scmp.ne.s32.totalorder %s173, %s174
      %p183 = scmp.eq.s32.totalorder %s32, 0
      %p184 = por %p182, %p183
      %p185 = scmp.ne.s32.totalorder %s173, %s174
      %p186 = scmp.eq.s32.totalorder %s33, 1
      %p187 = por %p185, %p186
      %p189 = scmp.ne.s32.totalorder %s174, %s188
      %p190 = scmp.eq.s32.totalorder %s33, 0
      %p191 = por %p189, %p190
      %s193 = sadd.s32 %s192, 1
      %p196 = scmp.eq.s32.totalorder %s27, 1
      %p197 = scmp.ne.s32.totalorder %s192, %s194
      %p198 = scmp.eq.s32.totalorder %s27, 0
      %p199 = por %p197, %p198
      %p200 = scmp.ne.s32.totalorder %s192, %s194
      %p201 = scmp.eq.s32.totalorder %s32, 1
      %p202 = por %p200, %p201
      %p203 = scmp.ne.s32.totalorder %s194, %s195
      %p204 = scmp.eq.s32.totalorder %s32, 0
      %p205 = por %p203, %p204
      %p206 = scmp.ne.s32.totalorder %s194, %s195
      %p207 = scmp.eq.s32.totalorder %s33, 1
      %p208 = por %p206, %p207
      %p210 = scmp.ne.s32.totalorder %s195, %s209
      %p211 = scmp.eq.s32.totalorder %s33, 0
      %p212 = por %p210, %p211
      %s214 = sadd.s32 %s213, 1
      %p217 = scmp.eq.s32.totalorder %s27, 1
      %p218 = scmp.ne.s32.totalorder %s213, %s215
      %p219 = scmp.eq.s32.totalorder %s27, 0
      %p220 = por %p218, %p219
      %p221 = scmp.ne.s32.totalorder %s213, %s215
      %p222 = scmp.eq.s32.totalorder %s32, 1
      %p223 = por %p221, %p222
      %p224 = scmp.ne.s32.totalorder %s215, %s216
      %p225 = scmp.eq.s32.totalorder %s32, 0
      %p226 = por %p224, %p225
      %p227 = scmp.ne.s32.totalorder %s215, %s216
      %p228 = scmp.eq.s32.totalorder %s33, 1
      %p229 = por %p227, %p228
      %p231 = scmp.ne.s32.totalorder %s216, %s230
      %p232 = scmp.eq.s32.totalorder %s33, 0
      %p233 = por %p231, %p232
      %s235 = sadd.s32 %s234, 1
      %p238 = scmp.eq.s32.totalorder %s27, 1
      %p239 = scmp.ne.s32.totalorder %s234, %s236
      %p240 = scmp.eq.s32.totalorder %s27, 0
      %p241 = por %p239, %p240
      %p242 = scmp.ne.s32.totalorder %s234, %s236
      %p243 = scmp.eq.s32.totalorder %s32, 1
      %p244 = por %p242, %p243
      %p245 = scmp.ne.s32.totalorder %s236, %s237
      %p246 = scmp.eq.s32.totalorder %s32, 0
      %p247 = por %p245, %p246
      %p248 = scmp.ne.s32.totalorder %s236, %s237
      %p249 = scmp.eq.s32.totalorder %s33, 1
      %p250 = por %p248, %p249
      %p252 = scmp.ne.s32.totalorder %s237, %s251
      %p253 = scmp.eq.s32.totalorder %s33, 0
      %p254 = por %p252, %p253
      %s255 = ssub.s32 %s27, %s34
      %p256 = scmp.eq.s32.totalorder %s255, 0
      %s258 = sadd.s32 %s257, 1
      %s259 = scalar_select %p256, %s257, %s258
      %p262 = pneg %p256
      %p263 = scmp.eq.s32.totalorder %s27, 1
      %p264 = por %p262, %p263
      %p265 = scmp.ne.s32.totalorder %s257, %s260
      %p266 = scmp.eq.s32.totalorder %s27, 0
      %p267 = por %p265, %p266
      %p268 = scmp.ne.s32.totalorder %s257, %s260
      %p269 = scmp.eq.s32.totalorder %s32, 1
      %p270 = por %p268, %p269
      %p271 = scmp.ne.s32.totalorder %s260, %s261
      %p272 = scmp.eq.s32.totalorder %s32, 0
      %p273 = por %p271, %p272
      %p274 = scmp.ne.s32.totalorder %s260, %s261
      %p275 = scmp.eq.s32.totalorder %s33, 1
      %p276 = por %p274, %p275
      %p278 = scmp.ne.s32.totalorder %s261, %s277
      %p279 = scmp.eq.s32.totalorder %s33, 0
      %p280 = por %p278, %p279
      %p281 = scmp.le.s32.totalorder 1, %s27
      %p282 = scmp.lt.s32.totalorder %s27, 3
      %p283 = pnand %p281, %p282
      %p284 = pneg %p283
      // Predicated region
      $region9: #{tpu_custom_call.1} parent=5 // pred_check
        _
      $region10: #{tpu_custom_call.1} parent=5 // pred_check_branch
        %286 = sbr.rel (%p283) target = $region12
      $region11: #{tpu_custom_call.1} parent=5 // pred_region
        %s287 = ssub.s32 %s27, 1
        // Predicated region
        $region13: #{tpu_custom_call.1} parent=11 // pred_check
          %p288 = pneg %p100
        $region14: #{tpu_custom_call.1} parent=11 // pred_check_branch
          %290 = sbr.rel (%p288) target = $region16
        $region15: #{tpu_custom_call.1} parent=11 // pred_region
          %s292 = ssub.s32 3072, 3072
          %293 = vsyncadd [#allocation7], %s292
          %s294 = sshll.u32 [#allocation8], 4
          %s295 = int_to_ptr.vmem [resolvable:$true] %s294
          %300 = dma.hbm_to_vmem [thread:$0]  %s2, 3072, %s295, [#allocation7], 192, 192, 12
        $region16: #{tpu_custom_call.1} parent=11 // pred_fallthru
          _
        // Predicated region
        $region17: #{tpu_custom_call.1} parent=11 // pred_check
          %p301 = pneg %p121
        $region18: #{tpu_custom_call.1} parent=11 // pred_check_branch
          %303 = sbr.rel (%p301) target = $region20
        $region19: #{tpu_custom_call.1} parent=11 // pred_region
          _
        $region20: #{tpu_custom_call.1} parent=11 // pred_fallthru
          _
        // Predicated region
        $region21: #{tpu_custom_call.1} parent=11 // pred_check
          %p304 = pneg %p142
        $region22: #{tpu_custom_call.1} parent=11 // pred_check_branch
          %306 = sbr.rel (%p304) target = $region24
        $region23: #{tpu_custom_call.1} parent=11 // pred_region
          %s308 = ssub.s32 1024, 1024
          %309 = vsyncadd [#allocation10], %s308
          %s310 = sshll.u32 [#allocation9], 4
          %s311 = int_to_ptr.vmem [resolvable:$true] %s310
          %316 = dma.hbm_to_vmem [thread:$0]  %s4, 1024, %s311, [#allocation10], 64, 64, 4
        $region24: #{tpu_custom_call.1} parent=11 // pred_fallthru
          _
        // Predicated region
        $region25: #{tpu_custom_call.1} parent=11 // pred_check
          %p317 = pneg %p163
        $region26: #{tpu_custom_call.1} parent=11 // pred_check_branch
          %319 = sbr.rel (%p317) target = $region28
        $region27: #{tpu_custom_call.1} parent=11 // pred_region
          _
        $region28: #{tpu_custom_call.1} parent=11 // pred_fallthru
          _
        // Predicated region
        $region29: #{tpu_custom_call.1} parent=11 // pred_check
          %p320 = pneg %p184
        $region30: #{tpu_custom_call.1} parent=11 // pred_check_branch
          %322 = sbr.rel (%p320) target = $region32
        $region31: #{tpu_custom_call.1} parent=11 // pred_region
          %s324 = ssub.s32 2048, 2048
          %325 = vsyncadd [#allocation10], %s324
          %s326 = sshll.u32 [#allocation11], 4
          %s327 = int_to_ptr.vmem [resolvable:$true] %s326
          %332 = dma.hbm_to_vmem [thread:$0]  %s6, 2048, %s327, [#allocation10], 128, 128, 8
        $region32: #{tpu_custom_call.1} parent=11 // pred_fallthru
          _
        // Predicated region
        $region33: #{tpu_custom_call.1} parent=11 // pred_check
          %p333 = pneg %p205
        $region34: #{tpu_custom_call.1} parent=11 // pred_check_branch
          %335 = sbr.rel (%p333) target = $region36
        $region35: #{tpu_custom_call.1} parent=11 // pred_region
          _
        $region36: #{tpu_custom_call.1} parent=11 // pred_fallthru
          _
        // Predicated region
        $region37: #{tpu_custom_call.1} parent=11 // pred_check
          %p336 = pneg %p226
        $region38: #{tpu_custom_call.1} parent=11 // pred_check_branch
          %338 = sbr.rel (%p336) target = $region40
        $region39: #{tpu_custom_call.1} parent=11 // pred_region
          %s340 = ssub.s32 2048, 2048
          %341 = vsyncadd [#allocation13], %s340
          %s342 = sshll.u32 [#allocation12], 4
          %s343 = int_to_ptr.vmem [resolvable:$true] %s342
          %348 = dma.hbm_to_vmem [thread:$0]  %s8, 2048, %s343, [#allocation13], 64, 64, 4
        $region40: #{tpu_custom_call.1} parent=11 // pred_fallthru
          _
        // Predicated region
        $region41: #{tpu_custom_call.1} parent=11 // pred_check
          %p349 = pneg %p247
        $region42: #{tpu_custom_call.1} parent=11 // pred_check_branch
          %351 = sbr.rel (%p349) target = $region44
        $region43: #{tpu_custom_call.1} parent=11 // pred_region
          _
        $region44: #{tpu_custom_call.1} parent=11 // pred_fallthru
          _
      $region12: #{tpu_custom_call.1} parent=5 // pred_fallthru
        _
      %p352 = scmp.lt.s32.totalorder %s27, 2
      // Predicated region
      $region45: #{tpu_custom_call.1} parent=5 // pred_check
        %p353 = pneg %p352
      $region46: #{tpu_custom_call.1} parent=5 // pred_check_branch
        %355 = sbr.rel (%p353) target = $region48
      $region47: #{tpu_custom_call.1} parent=5 // pred_region
        // Predicated region
        $region49: #{tpu_custom_call.1} parent=47 // pred_check
          %p356 = pneg %p47
        $region50: #{tpu_custom_call.1} parent=47 // pred_check_branch
          %358 = sbr.rel (%p356) target = $region52
        $region51: #{tpu_custom_call.1} parent=47 // pred_region
          %s359 = sand.u32 %s37, 1
          %s360 = scalar_lea.sflag [#allocation4], %s359
          %s361 = sand.u32 %s37, 1
          %s362 = smul.addr %s361, 16
          %s363 = scalar_lea.vmem [#allocation3], %s362
          %s365 = ssub.s32 256, 256
          %366 = vsyncadd %s360, %s365
          %s367 = smul.addr %s27, 2
          %s368 = smul.addr %s367, 128
          %s369 = scalar_lea.hbm %s0, %s368
          %s370 = sshll.u32 %s363, 4
          %s371 = int_to_ptr.vmem [resolvable:$true] %s370
          %376 = dma.hbm_to_vmem [thread:$0]  %s369, 256, %s371, %s360, 128, 128, 8
        $region52: #{tpu_custom_call.1} parent=47 // pred_fallthru
          _
        // Predicated region
        $region53: #{tpu_custom_call.1} parent=47 // pred_check
          %p377 = pneg %p73
        $region54: #{tpu_custom_call.1} parent=47 // pred_check_branch
          %379 = sbr.rel (%p377) target = $region56
        $region55: #{tpu_custom_call.1} parent=47 // pred_region
          %s380 = sand.u32 %s27, 1
          %s381 = scalar_lea.sflag [#allocation7], %s380
          %s382 = sand.u32 %s63, 1
          %s383 = scalar_lea.vmem [#allocation6], %s382
          %s385 = ssub.s32 16, 16
          %386 = vsyncadd %s381, %s385
          %s387 = smul.addr %s27, 16
          %s388 = scalar_lea.hbm %s1, %s387
          %s390 = sshll.u32 %s383, 4
          %s391 = int_to_ptr.vmem [resolvable:$true] %s390
          %393 = dma.hbm_to_vmem [thread:$0]  %s388, 16, %s391, %s381
        $region56: #{tpu_custom_call.1} parent=47 // pred_fallthru
          _
      $region48: #{tpu_custom_call.1} parent=5 // pred_fallthru
        _
      %p394 = scmp.le.s32.totalorder 1, %s27
      %p395 = scmp.lt.s32.totalorder %s27, 3
      %p396 = pnand %p394, %p395
      %p397 = pneg %p396
      // Predicated region
      $region57: #{tpu_custom_call.1} parent=5 // pred_check
        _
      $region58: #{tpu_custom_call.1} parent=5 // pred_check_branch
        %399 = sbr.rel (%p396) target = $region60
      $region59: #{tpu_custom_call.1} parent=5 // pred_region
        %s400 = ssub.s32 %s27, 1
        %s401 = sand.u32 %s40, 1
        %s402 = scalar_lea.sflag [#allocation4], %s401
        %s403 = sand.u32 %s40, 1
        %s404 = smul.addr %s403, 16
        %s405 = scalar_lea.vmem [#allocation3], %s404
        // Predicated region
        $region61: #{tpu_custom_call.1} parent=59 // pred_check
          %p406 = pneg %p53
        $region62: #{tpu_custom_call.1} parent=59 // pred_check_branch
          %408 = sbr.rel (%p406) target = $region64
        $region63: #{tpu_custom_call.1} parent=59 // pred_region
          %409 = dma.done %s402, 256
        $region64: #{tpu_custom_call.1} parent=59 // pred_fallthru
          _
        %s410 = sand.u32 %s32, 1
        %s411 = scalar_lea.sflag [#allocation7], %s410
        %s412 = sand.u32 %s66, 1
        %s413 = scalar_lea.vmem [#allocation6], %s412
        // Predicated region
        $region65: #{tpu_custom_call.1} parent=59 // pred_check
          %p414 = pneg %p79
        $region66: #{tpu_custom_call.1} parent=59 // pred_check_branch
          %416 = sbr.rel (%p414) target = $region68
        $region67: #{tpu_custom_call.1} parent=59 // pred_region
          %417 = dma.done %s411, 16
        $region68: #{tpu_custom_call.1} parent=59 // pred_fallthru
          _
        // Predicated region
        $region69: #{tpu_custom_call.1} parent=59 // pred_check
          %p418 = pneg %p100
        $region70: #{tpu_custom_call.1} parent=59 // pred_check_branch
          %420 = sbr.rel (%p418) target = $region72
        $region71: #{tpu_custom_call.1} parent=59 // pred_region
          %421 = dma.done [#allocation7], 3072
        $region72: #{tpu_custom_call.1} parent=59 // pred_fallthru
          _
        // Predicated region
        $region73: #{tpu_custom_call.1} parent=59 // pred_check
          %p422 = pneg %p142
        $region74: #{tpu_custom_call.1} parent=59 // pred_check_branch
          %424 = sbr.rel (%p422) target = $region76
        $region75: #{tpu_custom_call.1} parent=59 // pred_region
          %425 = dma.done [#allocation10], 1024
        $region76: #{tpu_custom_call.1} parent=59 // pred_fallthru
          _
        // Predicated region
        $region77: #{tpu_custom_call.1} parent=59 // pred_check
          %p426 = pneg %p184
        $region78: #{tpu_custom_call.1} parent=59 // pred_check_branch
          %428 = sbr.rel (%p426) target = $region80
        $region79: #{tpu_custom_call.1} parent=59 // pred_region
          %429 = dma.done [#allocation10], 2048
        $region80: #{tpu_custom_call.1} parent=59 // pred_fallthru
          _
        // Predicated region
        $region81: #{tpu_custom_call.1} parent=59 // pred_check
          %p430 = pneg %p226
        $region82: #{tpu_custom_call.1} parent=59 // pred_check_branch
          %432 = sbr.rel (%p430) target = $region84
        $region83: #{tpu_custom_call.1} parent=59 // pred_region
          %433 = dma.done [#allocation13], 2048
        $region84: #{tpu_custom_call.1} parent=59 // pred_fallthru
          _
        %s434 = sand.u32 %s40, 1
        %s435 = scalar_lea.sflag [#allocation4], %s434
        %s436 = sand.u32 %s40, 1
        %s437 = smul.addr %s436, 16
        %s438 = scalar_lea.vmem [#allocation3], %s437
        %p439 = pneg %p53
        %p440 = pneg %p50
        %s441 = sand.u32 %s32, 1
        %s442 = scalar_lea.sflag [#allocation7], %s441
        %s443 = sand.u32 %s66, 1
        %s444 = scalar_lea.vmem [#allocation6], %s443
        %p445 = pneg %p79
        %p446 = pneg %p76
        %p447 = pneg %p100
        %p448 = pneg %p97
        %p449 = pneg %p121
        %p450 = pneg %p118
        %p451 = pneg %p142
        %p452 = pneg %p139
        %p453 = pneg %p163
        %p454 = pneg %p160
        %p455 = pneg %p184
        %p456 = pneg %p181
        %p457 = pneg %p205
        %p458 = pneg %p202
        %p459 = pneg %p226
        %p460 = pneg %p223
        %p461 = pneg %p247
        %p462 = pneg %p244
        %p463 = pneg %p273
        %p464 = pneg %p270
        %s465 = sand.u32 %s260, 1
        %s466 = scalar_lea.sflag [#allocation5], %s465
        %s467 = sand.u32 %s260, 1
        %s468 = smul.addr %s467, 16
        %s469 = scalar_lea.vmem [#allocation14], %s468
        %v471 = vld [vmem:[%s405] sm:$0xff]
        %v472 = vld [vmem:[%s405 + $0x8] sm:$0xff]
        %v473 = vpack.c.bf16 %v472, %v471
        %v474 = vld [vmem:[#allocation8] sm:$0xff]
        %v475 = vld [vmem:[#allocation8 + $0x8] sm:$0xf]
        %v476 = vld [vmem:[#allocation8 + $0xc] sm:$0xff]
        %v477 = vld [vmem:[#allocation8 + $0x14] sm:$0xf]
        %v478 = vld [vmem:[#allocation8 + $0x18] sm:$0xff]
        %v479 = vld [vmem:[#allocation8 + $0x20] sm:$0xf]
        %v480 = vld [vmem:[#allocation8 + $0x24] sm:$0xff]
        %v481 = vld [vmem:[#allocation8 + $0x2c] sm:$0xf]
        %v482 = vld [vmem:[#allocation8 + $0x30] sm:$0xff]
        %v483 = vld [vmem:[#allocation8 + $0x38] sm:$0xf]
        %v484 = vld [vmem:[#allocation8 + $0x3c] sm:$0xff]
        %v485 = vld [vmem:[#allocation8 + $0x44] sm:$0xf]
        %v486 = vld [vmem:[#allocation8 + $0x48] sm:$0xff]
        %v487 = vld [vmem:[#allocation8 + $0x50] sm:$0xf]
        %v488 = vld [vmem:[#allocation8 + $0x54] sm:$0xff]
        %v489 = vld [vmem:[#allocation8 + $0x5c] sm:$0xf]
        %v490 = vld [vmem:[#allocation8 + $0x60] sm:$0xff]
        %v491 = vld [vmem:[#allocation8 + $0x68] sm:$0xf]
        %v492 = vld [vmem:[#allocation8 + $0x6c] sm:$0xff]
        %v493 = vld [vmem:[#allocation8 + $0x74] sm:$0xf]
        %v494 = vld [vmem:[#allocation8 + $0x78] sm:$0xff]
        %v495 = vld [vmem:[#allocation8 + $0x80] sm:$0xf]
        %v496 = vld [vmem:[#allocation8 + $0x84] sm:$0xff]
        %v497 = vld [vmem:[#allocation8 + $0x8c] sm:$0xf]
        %v498 = vld [vmem:[#allocation8 + $0x90] sm:$0xff]
        %v499 = vld [vmem:[#allocation8 + $0x98] sm:$0xf]
        %v500 = vld [vmem:[#allocation8 + $0x9c] sm:$0xff]
        %v501 = vld [vmem:[#allocation8 + $0xa4] sm:$0xf]
        %v502 = vld [vmem:[#allocation8 + $0xa8] sm:$0xff]
        %v503 = vld [vmem:[#allocation8 + $0xb0] sm:$0xf]
        %v504 = vld [vmem:[#allocation8 + $0xb4] sm:$0xff]
        %v505 = vld [vmem:[#allocation8 + $0xbc] sm:$0xf]
        %v506 = vld [vmem:[%s3] sm:$0x7]
        %v508 = vlaneseq
        %v509 = vshrl.u32 %v508, 7
        %v510 = vsub.s32 0, %v509
        %v511 = vrot.slane %v506, %v510
        %v512 = vlaneseq
        %v513 = vshrl.u32 %v512, 7
        %v514 = vsub.s32 1, %v513
        %v515 = vrot.slane %v506, %v514
        %v516 = vlaneseq
        %v517 = vshrl.u32 %v516, 7
        %v518 = vsub.s32 2, %v517
        %v519 = vrot.slane %v506, %v518
        %v555 = vunpack.c.l.b16 %v474
        %v556 = vunpack.c.h.b16 %v474
        %v557 = vunpack.c.l.b16 %v475
        %v558 = vunpack.c.l.b16 %v476
        %v559 = vunpack.c.h.b16 %v476
        %v560 = vunpack.c.l.b16 %v477
        %v561 = vunpack.c.l.b16 %v478
        %v562 = vunpack.c.h.b16 %v478
        %v563 = vunpack.c.l.b16 %v479
        %v564 = vunpack.c.l.b16 %v480
        %v565 = vunpack.c.h.b16 %v480
        %v566 = vunpack.c.l.b16 %v481
        %v567 = vunpack.c.l.b16 %v482
        %v568 = vunpack.c.h.b16 %v482
        %v569 = vunpack.c.l.b16 %v483
        %v570 = vunpack.c.l.b16 %v484
        %v571 = vunpack.c.h.b16 %v484
        %v572 = vunpack.c.l.b16 %v485
        %v573 = vunpack.c.l.b16 %v486
        %v574 = vunpack.c.h.b16 %v486
        %v575 = vunpack.c.l.b16 %v487
        %v576 = vunpack.c.l.b16 %v488
        %v577 = vunpack.c.h.b16 %v488
        %v578 = vunpack.c.l.b16 %v489
        %v579 = vunpack.c.l.b16 %v490
        %v580 = vunpack.c.h.b16 %v490
        %v581 = vunpack.c.l.b16 %v491
        %v582 = vunpack.c.l.b16 %v492
        %v583 = vunpack.c.h.b16 %v492
        %v584 = vunpack.c.l.b16 %v493
        %v585 = vunpack.c.l.b16 %v494
        %v586 = vunpack.c.h.b16 %v494
        %v587 = vunpack.c.l.b16 %v495
        %v588 = vunpack.c.l.b16 %v496
        %v589 = vunpack.c.h.b16 %v496
        %v590 = vunpack.c.l.b16 %v497
        %v591 = vunpack.c.l.b16 %v498
        %v592 = vunpack.c.h.b16 %v498
        %v593 = vunpack.c.l.b16 %v499
        %v594 = vunpack.c.l.b16 %v500
        %v595 = vunpack.c.h.b16 %v500
        %v596 = vunpack.c.l.b16 %v501
        %v597 = vunpack.c.l.b16 %v502
        %v598 = vunpack.c.h.b16 %v502
        %v599 = vunpack.c.l.b16 %v503
        %v600 = vunpack.c.l.b16 %v504
        %v601 = vunpack.c.h.b16 %v504
        %v602 = vunpack.c.l.b16 %v505
        %v603 = vpack.c.b16 %v558, %v555
        %v604 = vpack.c.b16 %v559, %v556
        %v605 = vpack.c.b16 %v560, %v557
        %v606 = vpack.c.b16 %v564, %v561
        %v607 = vpack.c.b16 %v565, %v562
        %v608 = vpack.c.b16 %v566, %v563
        %v609 = vpack.c.b16 %v570, %v567
        %v610 = vpack.c.b16 %v571, %v568
        %v611 = vpack.c.b16 %v572, %v569
        %v612 = vpack.c.b16 %v576, %v573
        %v613 = vpack.c.b16 %v577, %v574
        %v614 = vpack.c.b16 %v578, %v575
        %v615 = vpack.c.b16 %v582, %v579
        %v616 = vpack.c.b16 %v583, %v580
        %v617 = vpack.c.b16 %v584, %v581
        %v618 = vpack.c.b16 %v588, %v585
        %v619 = vpack.c.b16 %v589, %v586
        %v620 = vpack.c.b16 %v590, %v587
        %v621 = vpack.c.b16 %v594, %v591
        %v622 = vpack.c.b16 %v595, %v592
        %v623 = vpack.c.b16 %v596, %v593
        %v624 = vpack.c.b16 %v600, %v597
        %v625 = vpack.c.b16 %v601, %v598
        %v626 = vpack.c.b16 %v602, %v599
        %651 = vmatprep.subr.bf16.mxu0 %v625
        %652 = vmatpush1.bf16.msra.mxu0 %v624
        %653 = vmatprep.subr.bf16.mxu0 %v622
        %654 = vmatpush1.bf16.msra.mxu0 %v621
        %655 = vmatprep.subr.bf16.mxu0 %v619
        %656 = vmatpush1.bf16.msra.mxu0 %v618
        %657 = vmatprep.subr.bf16.mxu0 %v616
        %658 = vmatpush1.bf16.msra.mxu0 %v615
        %659 = vmatprep.subr.bf16.mxu0 %v613
        %660 = vmatpush1.bf16.msra.mxu0 %v612
        %661 = vmatprep.subr.bf16.mxu0 %v610
        %662 = vmatpush1.bf16.msra.mxu0 %v609
        %663 = vmatprep.subr.bf16.mxu0 %v607
        %664 = vmatpush1.bf16.msra.mxu0 %v606
        %665 = vmatprep.subr.bf16.mxu0 %v604
        %666 = vmatpush1.bf16.msra.mxu0 %v603
        %667 = vmatprep.subr.bf16.mxu0 0
        %668 = vmatpush2.bf16.msra.mxu0 0
        %669 = vmatprep.subr.bf16.mxu0 0
        %670 = vmatpush2.bf16.msra.mxu0 0
        %671 = vmatprep.subr.bf16.mxu0 0
        %672 = vmatpush2.bf16.msra.mxu0 0
        %673 = vmatprep.subr.bf16.mxu0 0
        %674 = vmatpush2.bf16.msra.mxu0 0
        %675 = vmatprep.subr.bf16.mxu0 0
        %676 = vmatpush2.bf16.msra.mxu0 0
        %677 = vmatprep.subr.bf16.mxu0 0
        %678 = vmatpush2.bf16.msra.mxu0 0
        %679 = vmatprep.subr.bf16.mxu0 0
        %680 = vmatpush2.bf16.msra.mxu0 0
        %681 = vmatprep.subr.bf16.mxu0 0
        %682 = vmatpush2.bf16.msra.mxu0 0
        %683 = vmatprep.mubr.bf16.mxu0 0
        %684 = vmatmul.mubr.bf16.gmra.mxu0 %v473
        %v685 = vpop.f32.mrf.mxu0
        %v686 = vadd.f32 %v511, %v685
        %v687 = vpop.f32.mrf.mxu0
        %v688 = vadd.f32 %v515, %v687
        %v689 = vpop.f32.mrf.mxu0
        %v690 = vadd.f32 %v511, %v689
        %v691 = vpop.f32.mrf.mxu0
        %v692 = vadd.f32 %v515, %v691
        %693 = vdwg.mxu0
        %694 = vmatprep.subr.bf16.mxu0 0
        %695 = vmatpush1.bf16.msra.mxu0 %v626
        %696 = vmatprep.subr.bf16.mxu0 0
        %697 = vmatpush1.bf16.msra.mxu0 %v623
        %698 = vmatprep.subr.bf16.mxu0 0
        %699 = vmatpush1.bf16.msra.mxu0 %v620
        %700 = vmatprep.subr.bf16.mxu0 0
        %701 = vmatpush1.bf16.msra.mxu0 %v617
        %702 = vmatprep.subr.bf16.mxu0 0
        %703 = vmatpush1.bf16.msra.mxu0 %v614
        %704 = vmatprep.subr.bf16.mxu0 0
        %705 = vmatpush1.bf16.msra.mxu0 %v611
        %706 = vmatprep.subr.bf16.mxu0 0
        %707 = vmatpush1.bf16.msra.mxu0 %v608
        %708 = vmatprep.subr.bf16.mxu0 0
        %709 = vmatpush1.bf16.msra.mxu0 %v605
        %710 = vmatprep.subr.bf16.mxu0 0
        %711 = vmatpush2.bf16.msra.mxu0 0
        %712 = vmatprep.subr.bf16.mxu0 0
        %713 = vmatpush2.bf16.msra.mxu0 0
        %714 = vmatprep.subr.bf16.mxu0 0
        %715 = vmatpush2.bf16.msra.mxu0 0
        %716 = vmatprep.subr.bf16.mxu0 0
        %717 = vmatpush2.bf16.msra.mxu0 0
        %718 = vmatprep.subr.bf16.mxu0 0
        %719 = vmatpush2.bf16.msra.mxu0 0
        %720 = vmatprep.subr.bf16.mxu0 0
        %721 = vmatpush2.bf16.msra.mxu0 0
        %722 = vmatprep.subr.bf16.mxu0 0
        %723 = vmatpush2.bf16.msra.mxu0 0
        %724 = vmatprep.subr.bf16.mxu0 0
        %725 = vmatpush2.bf16.msra.mxu0 0
        %726 = vmatprep.mubr.bf16.mxu0 0
        %727 = vmatmul.mubr.bf16.gmra.mxu0 %v473
        %v728 = vpop.f32.mrf.mxu0
        %v729 = vadd.f32 %v519, %v728
        %v730 = vpop.f32.mrf.mxu0
        %v731 = vpop.f32.mrf.mxu0
        %v732 = vadd.f32 %v519, %v731
        %v733 = vpop.f32.mrf.mxu0
        %734 = vdwg.mxu0
        %v735 = vmul.f32 %v686, 0.17677669
        %v736 = vmul.f32 %v690, 0.17677669
        %v737 = vld [vmem:[%s413] sm:$0x1]
        %v738 = vpack.c.bf16 %v736, %v735
        %v739 = vpack.c.bf16 %v692, %v688
        %v740 = vpack.c.bf16 %v732, %v729
        %v742 = vlaneseq
        %v743 = vshrl.u32 %v742, 7
        %v744 = vsub.s32 0, %v743
        %v745 = vrot.slane %v737, %v744
        %vm747 = vcmask 261120
        %v749 = vsel %vm747, %v738, 0
        %v752 = vsel %vm747, %v739, 0
        %754 = vmatprep.subr.bf16.mxu0 0
        %755 = vmatpush1.bf16.xpose.msra.mxu0 0
        %756 = vmatprep.subr.bf16.mxu0 0
        %757 = vmatpush1.bf16.xpose.msra.mxu0 0
        %758 = vmatprep.subr.bf16.mxu0 0
        %759 = vmatpush1.bf16.xpose.msra.mxu0 0
        %760 = vmatprep.subr.bf16.mxu0 0
        %761 = vmatpush1.bf16.xpose.msra.mxu0 0
        %762 = vmatprep.subr.bf16.mxu0 0
        %763 = vmatpush1.bf16.xpose.msra.mxu0 0
        %764 = vmatprep.subr.bf16.mxu0 0
        %765 = vmatpush1.bf16.xpose.msra.mxu0 0
        %766 = vmatprep.subr.bf16.mxu0 0
        %767 = vmatpush1.bf16.xpose.msra.mxu0 0
        %768 = vmatprep.subr.bf16.mxu0 0
        %769 = vmatpush1.bf16.xpose.msra.mxu0 %v752
        %770 = vmatprep.subr.bf16.mxu0 0
        %771 = vmatpush2.bf16.xpose.msra.mxu0 0
        %772 = vmatprep.subr.bf16.mxu0 0
        %773 = vmatpush2.bf16.xpose.msra.mxu0 0
        %774 = vmatprep.subr.bf16.mxu0 0
        %775 = vmatpush2.bf16.xpose.msra.mxu0 0
        %776 = vmatprep.subr.bf16.mxu0 0
        %777 = vmatpush2.bf16.xpose.msra.mxu0 0
        %778 = vmatprep.subr.bf16.mxu0 0
        %779 = vmatpush2.bf16.xpose.msra.mxu0 0
        %780 = vmatprep.subr.bf16.mxu0 0
        %781 = vmatpush2.bf16.xpose.msra.mxu0 0
        %782 = vmatprep.subr.bf16.mxu0 0
        %783 = vmatpush2.bf16.xpose.msra.mxu0 0
        %784 = vmatprep.subr.bf16.mxu0 0
        %785 = vmatpush2.bf16.xpose.msra.mxu0 0
        %786 = vmatprep.mubr.bf16.mxu0 0
        %787 = vmatmul.mubr.bf16.gmra.mxu0 %v749
        %v788 = vpop.f32.mrf.mxu0
        %v789 = vadd.f32 %v745, %v788
        %v790 = vpop.f32.mrf.mxu0
        %v791 = vpop.f32.mrf.mxu0
        %v792 = vadd.f32 %v745, %v791
        %v793 = vpop.f32.mrf.mxu0
        %794 = vdwg.mxu0
        %vm795 = vcmask 130048
        %v796 = vsel %vm795, %v789, -inf
        %797 = vmax.xlane.f32.xlu0 %v796
        %v798 = vpop.xlane.xlu0 %797
        %v799 = vsel %vm795, %v792, -inf
        %800 = vmax.xlane.f32.xlu0 %v799
        %v801 = vpop.xlane.xlu0 %800
        %v802 = vsub.f32 %v789, %v798
        %v803 = vsub.f32 %v792, %v801
        %v804 = vmul.f32 %v802, 1.442695
        %v805 = vpow.pop %v804
        %v806 = vmul.f32 %v803, 1.442695
        %v807 = vpow.pop %v806
        %v808 = vsel %vm795, %v805, 0.0
        %809 = vadd.xlane.f32.xlu0 %v808
        %v810 = vpop.xlane.xlu0 %809
        %v811 = vsel %vm795, %v807, 0.0
        %812 = vadd.xlane.f32.xlu0 %v811
        %v813 = vpop.xlane.xlu0 %812
        %v814 = vrcp.pop %v810
        %v815 = vrcp.pop %v813
        %v816 = vmul.f32 %v805, %v814
        %v817 = vmul.f32 %v807, %v815
        %v818 = vpack.c.bf16 %v817, %v816
        %v820 = vsel %vm795, %v818, 0
        %822 = vmatprep.subr.bf16.mxu0 0
        %823 = vmatpush1.bf16.msra.mxu0 0
        %824 = vmatprep.subr.bf16.mxu0 0
        %825 = vmatpush1.bf16.msra.mxu0 0
        %826 = vmatprep.subr.bf16.mxu0 0
        %827 = vmatpush1.bf16.msra.mxu0 0
        %828 = vmatprep.subr.bf16.mxu0 0
        %829 = vmatpush1.bf16.msra.mxu0 0
        %830 = vmatprep.subr.bf16.mxu0 0
        %831 = vmatpush1.bf16.msra.mxu0 0
        %832 = vmatprep.subr.bf16.mxu0 0
        %833 = vmatpush1.bf16.msra.mxu0 0
        %834 = vmatprep.subr.bf16.mxu0 0
        %835 = vmatpush1.bf16.msra.mxu0 0
        %836 = vmatprep.subr.bf16.mxu0 0
        %837 = vmatpush1.bf16.msra.mxu0 %v740
        %838 = vmatprep.subr.bf16.mxu0 0
        %839 = vmatpush2.bf16.msra.mxu0 0
        %840 = vmatprep.subr.bf16.mxu0 0
        %841 = vmatpush2.bf16.msra.mxu0 0
        %842 = vmatprep.subr.bf16.mxu0 0
        %843 = vmatpush2.bf16.msra.mxu0 0
        %844 = vmatprep.subr.bf16.mxu0 0
        %845 = vmatpush2.bf16.msra.mxu0 0
        %846 = vmatprep.subr.bf16.mxu0 0
        %847 = vmatpush2.bf16.msra.mxu0 0
        %848 = vmatprep.subr.bf16.mxu0 0
        %849 = vmatpush2.bf16.msra.mxu0 0
        %850 = vmatprep.subr.bf16.mxu0 0
        %851 = vmatpush2.bf16.msra.mxu0 0
        %852 = vmatprep.subr.bf16.mxu0 0
        %853 = vmatpush2.bf16.msra.mxu0 0
        %854 = vmatprep.mubr.bf16.mxu0 0
        %855 = vmatmul.mubr.bf16.gmra.mxu0 %v820
        %v856 = vpop.f32.mrf.mxu0
        %v857 = vadd.f32 0.0, %v856
        %v858 = vpop.f32.mrf.mxu0
        %v859 = vpop.f32.mrf.mxu0
        %v860 = vadd.f32 0.0, %v859
        %v861 = vpop.f32.mrf.mxu0
        %862 = vdwg.mxu0
        %863 = vst.msk [vmem:[#allocation2] sm:$0xff] %vm747, %v857
        %864 = vst.msk [vmem:[#allocation2 + $0x8] sm:$0xff] %vm747, %v860
        %866 = vrot.lane.b32.xlu0 %v738, 96
        %v867 = vpop.permute.xlu0 %866
        %869 = vrot.lane.b32.xlu0 %v739, 96
        %v870 = vpop.permute.xlu0 %869
        %v872 = vsel %vm747, %v867, 0
        %v875 = vsel %vm747, %v870, 0
        %877 = vmatprep.subr.bf16.mxu0 0
        %878 = vmatpush1.bf16.xpose.msra.mxu0 0
        %879 = vmatprep.subr.bf16.mxu0 0
        %880 = vmatpush1.bf16.xpose.msra.mxu0 0
        %881 = vmatprep.subr.bf16.mxu0 0
        %882 = vmatpush1.bf16.xpose.msra.mxu0 0
        %883 = vmatprep.subr.bf16.mxu0 0
        %884 = vmatpush1.bf16.xpose.msra.mxu0 0
        %885 = vmatprep.subr.bf16.mxu0 0
        %886 = vmatpush1.bf16.xpose.msra.mxu0 0
        %887 = vmatprep.subr.bf16.mxu0 0
        %888 = vmatpush1.bf16.xpose.msra.mxu0 0
        %889 = vmatprep.subr.bf16.mxu0 0
        %890 = vmatpush1.bf16.xpose.msra.mxu0 0
        %891 = vmatprep.subr.bf16.mxu0 0
        %892 = vmatpush1.bf16.xpose.msra.mxu0 %v875
        %893 = vmatprep.subr.bf16.mxu0 0
        %894 = vmatpush2.bf16.xpose.msra.mxu0 0
        %895 = vmatprep.subr.bf16.mxu0 0
        %896 = vmatpush2.bf16.xpose.msra.mxu0 0
        %897 = vmatprep.subr.bf16.mxu0 0
        %898 = vmatpush2.bf16.xpose.msra.mxu0 0
        %899 = vmatprep.subr.bf16.mxu0 0
        %900 = vmatpush2.bf16.xpose.msra.mxu0 0
        %901 = vmatprep.subr.bf16.mxu0 0
        %902 = vmatpush2.bf16.xpose.msra.mxu0 0
        %903 = vmatprep.subr.bf16.mxu0 0
        %904 = vmatpush2.bf16.xpose.msra.mxu0 0
        %905 = vmatprep.subr.bf16.mxu0 0
        %906 = vmatpush2.bf16.xpose.msra.mxu0 0
        %907 = vmatprep.subr.bf16.mxu0 0
        %908 = vmatpush2.bf16.xpose.msra.mxu0 0
        %909 = vmatprep.mubr.bf16.mxu0 0
        %910 = vmatmul.mubr.bf16.gmra.mxu0 %v872
        %v911 = vpop.f32.mrf.mxu0
        %v912 = vadd.f32 %v745, %v911
        %v913 = vpop.f32.mrf.mxu0
        %v914 = vpop.f32.mrf.mxu0
        %v915 = vadd.f32 %v745, %v914
        %v916 = vpop.f32.mrf.mxu0
        %917 = vdwg.mxu0
        %v918 = vsel %vm795, %v912, -inf
        %919 = vmax.xlane.f32.xlu0 %v918
        %v920 = vpop.xlane.xlu0 %919
        %v921 = vsel %vm795, %v915, -inf
        %922 = vmax.xlane.f32.xlu0 %v921
        %v923 = vpop.xlane.xlu0 %922
        %v924 = vsub.f32 %v912, %v920
        %v925 = vsub.f32 %v915, %v923
        %v926 = vmul.f32 %v924, 1.442695
        %v927 = vpow.pop %v926
        %v928 = vmul.f32 %v925, 1.442695
        %v929 = vpow.pop %v928
        %v930 = vsel %vm795, %v927, 0.0
        %931 = vadd.xlane.f32.xlu0 %v930
        %v932 = vpop.xlane.xlu0 %931
        %v933 = vsel %vm795, %v929, 0.0
        %934 = vadd.xlane.f32.xlu0 %v933
        %v935 = vpop.xlane.xlu0 %934
        %v936 = vrcp.pop %v932
        %v937 = vrcp.pop %v935
        %v938 = vmul.f32 %v927, %v936
        %v939 = vmul.f32 %v929, %v937
        %v940 = vpack.c.bf16 %v939, %v938
        %942 = vrot.lane.b32.xlu0 %v740, 96
        %v943 = vpop.permute.xlu0 %942
        %v946 = vsel %vm795, %v940, 0
        %948 = vmatprep.subr.bf16.mxu0 0
        %949 = vmatpush1.bf16.msra.mxu0 0
        %950 = vmatprep.subr.bf16.mxu0 0
        %951 = vmatpush1.bf16.msra.mxu0 0
        %952 = vmatprep.subr.bf16.mxu0 0
        %953 = vmatpush1.bf16.msra.mxu0 0
        %954 = vmatprep.subr.bf16.mxu0 0
        %955 = vmatpush1.bf16.msra.mxu0 0
        %956 = vmatprep.subr.bf16.mxu0 0
        %957 = vmatpush1.bf16.msra.mxu0 0
        %958 = vmatprep.subr.bf16.mxu0 0
        %959 = vmatpush1.bf16.msra.mxu0 0
        %960 = vmatprep.subr.bf16.mxu0 0
        %961 = vmatpush1.bf16.msra.mxu0 0
        %962 = vmatprep.subr.bf16.mxu0 0
        %963 = vmatpush1.bf16.msra.mxu0 %v943
        %964 = vmatprep.subr.bf16.mxu0 0
        %965 = vmatpush2.bf16.msra.mxu0 0
        %966 = vmatprep.subr.bf16.mxu0 0
        %967 = vmatpush2.bf16.msra.mxu0 0
        %968 = vmatprep.subr.bf16.mxu0 0
        %969 = vmatpush2.bf16.msra.mxu0 0
        %970 = vmatprep.subr.bf16.mxu0 0
        %971 = vmatpush2.bf16.msra.mxu0 0
        %972 = vmatprep.subr.bf16.mxu0 0
        %973 = vmatpush2.bf16.msra.mxu0 0
        %974 = vmatprep.subr.bf16.mxu0 0
        %975 = vmatpush2.bf16.msra.mxu0 0
        %976 = vmatprep.subr.bf16.mxu0 0
        %977 = vmatpush2.bf16.msra.mxu0 0
        %978 = vmatprep.subr.bf16.mxu0 0
        %979 = vmatpush2.bf16.msra.mxu0 0
        %980 = vmatprep.mubr.bf16.mxu0 0
        %981 = vmatmul.mubr.bf16.gmra.mxu0 %v946
        %v982 = vpop.f32.mrf.mxu0
        %v983 = vadd.f32 0.0, %v982
        %v984 = vpop.f32.mrf.mxu0
        %v985 = vpop.f32.mrf.mxu0
        %v986 = vadd.f32 0.0, %v985
        %v987 = vpop.f32.mrf.mxu0
        %988 = vdwg.mxu0
        %991 = vrot.lane.b32.xlu0 %v983, 32
        %v992 = vpop.permute.xlu0 %991
        %993 = vrot.lane.b32.xlu0 %v986, 32
        %v994 = vpop.permute.xlu0 %993
        %vm997 = vcmask 523520
        %998 = vst.msk [vmem:[#allocation2] sm:$0xff] %vm997, %v992
        %999 = vst.msk [vmem:[#allocation2 + $0x8] sm:$0xff] %vm997, %v994
        %1000 = vrot.lane.b32.xlu0 %v738, 64
        %v1001 = vpop.permute.xlu0 %1000
        %1002 = vrot.lane.b32.xlu0 %v739, 64
        %v1003 = vpop.permute.xlu0 %1002
        %v1005 = vsel %vm747, %v1001, 0
        %v1008 = vsel %vm747, %v1003, 0
        %1010 = vmatprep.subr.bf16.mxu0 0
        %1011 = vmatpush1.bf16.xpose.msra.mxu0 0
        %1012 = vmatprep.subr.bf16.mxu0 0
        %1013 = vmatpush1.bf16.xpose.msra.mxu0 0
        %1014 = vmatprep.subr.bf16.mxu0 0
        %1015 = vmatpush1.bf16.xpose.msra.mxu0 0
        %1016 = vmatprep.subr.bf16.mxu0 0
        %1017 = vmatpush1.bf16.xpose.msra.mxu0 0
        %1018 = vmatprep.subr.bf16.mxu0 0
        %1019 = vmatpush1.bf16.xpose.msra.mxu0 0
        %1020 = vmatprep.subr.bf16.mxu0 0
        %1021 = vmatpush1.bf16.xpose.msra.mxu0 0
        %1022 = vmatprep.subr.bf16.mxu0 0
        %1023 = vmatpush1.bf16.xpose.msra.mxu0 0
        %1024 = vmatprep.subr.bf16.mxu0 0
        %1025 = vmatpush1.bf16.xpose.msra.mxu0 %v1008
        %1026 = vmatprep.subr.bf16.mxu0 0
        %1027 = vmatpush2.bf16.xpose.msra.mxu0 0
        %1028 = vmatprep.subr.bf16.mxu0 0
        %1029 = vmatpush2.bf16.xpose.msra.mxu0 0
        %1030 = vmatprep.subr.bf16.mxu0 0
        %1031 = vmatpush2.bf16.xpose.msra.mxu0 0
        %1032 = vmatprep.subr.bf16.mxu0 0
        %1033 = vmatpush2.bf16.xpose.msra.mxu0 0
        %1034 = vmatprep.subr.bf16.mxu0 0
        %1035 = vmatpush2.bf16.xpose.msra.mxu0 0
        %1036 = vmatprep.subr.bf16.mxu0 0
        %1037 = vmatpush2.bf16.xpose.msra.mxu0 0
        %1038 = vmatprep.subr.bf16.mxu0 0
        %1039 = vmatpush2.bf16.xpose.msra.mxu0 0
        %1040 = vmatprep.subr.bf16.mxu0 0
        %1041 = vmatpush2.bf16.xpose.msra.mxu0 0
        %1042 = vmatprep.mubr.bf16.mxu0 0
        %1043 = vmatmul.mubr.bf16.gmra.mxu0 %v1005
        %v1044 = vpop.f32.mrf.mxu0
        %v1045 = vadd.f32 %v745, %v1044
        %v1046 = vpop.f32.mrf.mxu0
        %v1047 = vpop.f32.mrf.mxu0
        %v1048 = vadd.f32 %v745, %v1047
        %v1049 = vpop.f32.mrf.mxu0
        %1050 = vdwg.mxu0
        %v1051 = vsel %vm795, %v1045, -inf
        %1052 = vmax.xlane.f32.xlu0 %v1051
        %v1053 = vpop.xlane.xlu0 %1052
        %v1054 = vsel %vm795, %v1048, -inf
        %1055 = vmax.xlane.f32.xlu0 %v1054
        %v1056 = vpop.xlane.xlu0 %1055
        %v1057 = vsub.f32 %v1045, %v1053
        %v1058 = vsub.f32 %v1048, %v1056
        %v1059 = vmul.f32 %v1057, 1.442695
        %v1060 = vpow.pop %v1059
        %v1061 = vmul.f32 %v1058, 1.442695
        %v1062 = vpow.pop %v1061
        %v1063 = vsel %vm795, %v1060, 0.0
        %1064 = vadd.xlane.f32.xlu0 %v1063
        %v1065 = vpop.xlane.xlu0 %1064
        %v1066 = vsel %vm795, %v1062, 0.0
        %1067 = vadd.xlane.f32.xlu0 %v1066
        %v1068 = vpop.xlane.xlu0 %1067
        %v1069 = vrcp.pop %v1065
        %v1070 = vrcp.pop %v1068
        %v1071 = vmul.f32 %v1060, %v1069
        %v1072 = vmul.f32 %v1062, %v1070
        %v1073 = vpack.c.bf16 %v1072, %v1071
        %1074 = vrot.lane.b32.xlu0 %v740, 64
        %v1075 = vpop.permute.xlu0 %1074
        %v1078 = vsel %vm795, %v1073, 0
        %1080 = vmatprep.subr.bf16.mxu0 0
        %1081 = vmatpush1.bf16.msra.mxu0 0
        %1082 = vmatprep.subr.bf16.mxu0 0
        %1083 = vmatpush1.bf16.msra.mxu0 0
        %1084 = vmatprep.subr.bf16.mxu0 0
        %1085 = vmatpush1.bf16.msra.mxu0 0
        %1086 = vmatprep.subr.bf16.mxu0 0
        %1087 = vmatpush1.bf16.msra.mxu0 0
        %1088 = vmatprep.subr.bf16.mxu0 0
        %1089 = vmatpush1.bf16.msra.mxu0 0
        %1090 = vmatprep.subr.bf16.mxu0 0
        %1091 = vmatpush1.bf16.msra.mxu0 0
        %1092 = vmatprep.subr.bf16.mxu0 0
        %1093 = vmatpush1.bf16.msra.mxu0 0
        %1094 = vmatprep.subr.bf16.mxu0 0
        %1095 = vmatpush1.bf16.msra.mxu0 %v1075
        %1096 = vmatprep.subr.bf16.mxu0 0
        %1097 = vmatpush2.bf16.msra.mxu0 0
        %1098 = vmatprep.subr.bf16.mxu0 0
        %1099 = vmatpush2.bf16.msra.mxu0 0
        %1100 = vmatprep.subr.bf16.mxu0 0
        %1101 = vmatpush2.bf16.msra.mxu0 0
        %1102 = vmatprep.subr.bf16.mxu0 0
        %1103 = vmatpush2.bf16.msra.mxu0 0
        %1104 = vmatprep.subr.bf16.mxu0 0
        %1105 = vmatpush2.bf16.msra.mxu0 0
        %1106 = vmatprep.subr.bf16.mxu0 0
        %1107 = vmatpush2.bf16.msra.mxu0 0
        %1108 = vmatprep.subr.bf16.mxu0 0
        %1109 = vmatpush2.bf16.msra.mxu0 0
        %1110 = vmatprep.subr.bf16.mxu0 0
        %1111 = vmatpush2.bf16.msra.mxu0 0
        %1112 = vmatprep.mubr.bf16.mxu0 0
        %1113 = vmatmul.mubr.bf16.gmra.mxu0 %v1078
        %v1114 = vpop.f32.mrf.mxu0
        %v1115 = vadd.f32 0.0, %v1114
        %v1116 = vpop.f32.mrf.mxu0
        %v1117 = vpop.f32.mrf.mxu0
        %v1118 = vadd.f32 0.0, %v1117
        %v1119 = vpop.f32.mrf.mxu0
        %1120 = vdwg.mxu0
        %1123 = vrot.lane.b32.xlu0 %v1115, 64
        %v1124 = vpop.permute.xlu0 %1123
        %1125 = vrot.lane.b32.xlu0 %v1118, 64
        %v1126 = vpop.permute.xlu0 %1125
        %vm1129 = vcmask 785920
        %1130 = vst.msk [vmem:[#allocation2] sm:$0xff] %vm1129, %v1124
        %1131 = vst.msk [vmem:[#allocation2 + $0x8] sm:$0xff] %vm1129, %v1126
        %1132 = vrot.lane.b32.xlu0 %v738, 32
        %v1133 = vpop.permute.xlu0 %1132
        %1134 = vrot.lane.b32.xlu0 %v739, 32
        %v1135 = vpop.permute.xlu0 %1134
        %v1137 = vsel %vm747, %v1133, 0
        %v1140 = vsel %vm747, %v1135, 0
        %1142 = vmatprep.subr.bf16.mxu0 0
        %1143 = vmatpush1.bf16.xpose.msra.mxu0 0
        %1144 = vmatprep.subr.bf16.mxu0 0
        %1145 = vmatpush1.bf16.xpose.msra.mxu0 0
        %1146 = vmatprep.subr.bf16.mxu0 0
        %1147 = vmatpush1.bf16.xpose.msra.mxu0 0
        %1148 = vmatprep.subr.bf16.mxu0 0
        %1149 = vmatpush1.bf16.xpose.msra.mxu0 0
        %1150 = vmatprep.subr.bf16.mxu0 0
        %1151 = vmatpush1.bf16.xpose.msra.mxu0 0
        %1152 = vmatprep.subr.bf16.mxu0 0
        %1153 = vmatpush1.bf16.xpose.msra.mxu0 0
        %1154 = vmatprep.subr.bf16.mxu0 0
        %1155 = vmatpush1.bf16.xpose.msra.mxu0 0
        %1156 = vmatprep.subr.bf16.mxu0 0
        %1157 = vmatpush1.bf16.xpose.msra.mxu0 %v1140
        %1158 = vmatprep.subr.bf16.mxu0 0
        %1159 = vmatpush2.bf16.xpose.msra.mxu0 0
        %1160 = vmatprep.subr.bf16.mxu0 0
        %1161 = vmatpush2.bf16.xpose.msra.mxu0 0
        %1162 = vmatprep.subr.bf16.mxu0 0
        %1163 = vmatpush2.bf16.xpose.msra.mxu0 0
        %1164 = vmatprep.subr.bf16.mxu0 0
        %1165 = vmatpush2.bf16.xpose.msra.mxu0 0
        %1166 = vmatprep.subr.bf16.mxu0 0
        %1167 = vmatpush2.bf16.xpose.msra.mxu0 0
        %1168 = vmatprep.subr.bf16.mxu0 0
        %1169 = vmatpush2.bf16.xpose.msra.mxu0 0
        %1170 = vmatprep.subr.bf16.mxu0 0
        %1171 = vmatpush2.bf16.xpose.msra.mxu0 0
        %1172 = vmatprep.subr.bf16.mxu0 0
        %1173 = vmatpush2.bf16.xpose.msra.mxu0 0
        %1174 = vmatprep.mubr.bf16.mxu0 0
        %1175 = vmatmul.mubr.bf16.gmra.mxu0 %v1137
        %v1176 = vpop.f32.mrf.mxu0
        %v1177 = vadd.f32 %v745, %v1176
        %v1178 = vpop.f32.mrf.mxu0
        %v1179 = vpop.f32.mrf.mxu0
        %v1180 = vadd.f32 %v745, %v1179
        %v1181 = vpop.f32.mrf.mxu0
        %1182 = vdwg.mxu0
        %v1183 = vsel %vm795, %v1177, -inf
        %1184 = vmax.xlane.f32.xlu0 %v1183
        %v1185 = vpop.xlane.xlu0 %1184
        %v1186 = vsel %vm795, %v1180, -inf
        %1187 = vmax.xlane.f32.xlu0 %v1186
        %v1188 = vpop.xlane.xlu0 %1187
        %v1189 = vsub.f32 %v1177, %v1185
        %v1190 = vsub.f32 %v1180, %v1188
        %v1191 = vmul.f32 %v1189, 1.442695
        %v1192 = vpow.pop %v1191
        %v1193 = vmul.f32 %v1190, 1.442695
        %v1194 = vpow.pop %v1193
        %v1195 = vsel %vm795, %v1192, 0.0
        %1196 = vadd.xlane.f32.xlu0 %v1195
        %v1197 = vpop.xlane.xlu0 %1196
        %v1198 = vsel %vm795, %v1194, 0.0
        %1199 = vadd.xlane.f32.xlu0 %v1198
        %v1200 = vpop.xlane.xlu0 %1199
        %v1201 = vrcp.pop %v1197
        %v1202 = vrcp.pop %v1200
        %v1203 = vmul.f32 %v1192, %v1201
        %v1204 = vmul.f32 %v1194, %v1202
        %v1205 = vpack.c.bf16 %v1204, %v1203
        %1206 = vrot.lane.b32.xlu0 %v740, 32
        %v1207 = vpop.permute.xlu0 %1206
        %v1210 = vsel %vm795, %v1205, 0
        %1212 = vmatprep.subr.bf16.mxu0 0
        %1213 = vmatpush1.bf16.msra.mxu0 0
        %1214 = vmatprep.subr.bf16.mxu0 0
        %1215 = vmatpush1.bf16.msra.mxu0 0
        %1216 = vmatprep.subr.bf16.mxu0 0
        %1217 = vmatpush1.bf16.msra.mxu0 0
        %1218 = vmatprep.subr.bf16.mxu0 0
        %1219 = vmatpush1.bf16.msra.mxu0 0
        %1220 = vmatprep.subr.bf16.mxu0 0
        %1221 = vmatpush1.bf16.msra.mxu0 0
        %1222 = vmatprep.subr.bf16.mxu0 0
        %1223 = vmatpush1.bf16.msra.mxu0 0
        %1224 = vmatprep.subr.bf16.mxu0 0
        %1225 = vmatpush1.bf16.msra.mxu0 0
        %1226 = vmatprep.subr.bf16.mxu0 0
        %1227 = vmatpush1.bf16.msra.mxu0 %v1207
        %1228 = vmatprep.subr.bf16.mxu0 0
        %1229 = vmatpush2.bf16.msra.mxu0 0
        %1230 = vmatprep.subr.bf16.mxu0 0
        %1231 = vmatpush2.bf16.msra.mxu0 0
        %1232 = vmatprep.subr.bf16.mxu0 0
        %1233 = vmatpush2.bf16.msra.mxu0 0
        %1234 = vmatprep.subr.bf16.mxu0 0
        %1235 = vmatpush2.bf16.msra.mxu0 0
        %1236 = vmatprep.subr.bf16.mxu0 0
        %1237 = vmatpush2.bf16.msra.mxu0 0
        %1238 = vmatprep.subr.bf16.mxu0 0
        %1239 = vmatpush2.bf16.msra.mxu0 0
        %1240 = vmatprep.subr.bf16.mxu0 0
        %1241 = vmatpush2.bf16.msra.mxu0 0
        %1242 = vmatprep.subr.bf16.mxu0 0
        %1243 = vmatpush2.bf16.msra.mxu0 0
        %1244 = vmatprep.mubr.bf16.mxu0 0
        %1245 = vmatmul.mubr.bf16.gmra.mxu0 %v1210
        %v1246 = vpop.f32.mrf.mxu0
        %v1247 = vadd.f32 0.0, %v1246
        %v1248 = vpop.f32.mrf.mxu0
        %v1249 = vpop.f32.mrf.mxu0
        %v1250 = vadd.f32 0.0, %v1249
        %v1251 = vpop.f32.mrf.mxu0
        %1252 = vdwg.mxu0
        %1255 = vrot.lane.b32.xlu0 %v1247, 96
        %v1256 = vpop.permute.xlu0 %1255
        %1257 = vrot.lane.b32.xlu0 %v1250, 96
        %v1258 = vpop.permute.xlu0 %1257
        %vm1261 = vcmask 1048320
        %1262 = vst.msk [vmem:[#allocation2] sm:$0xff] %vm1261, %v1256
        %1263 = vst.msk [vmem:[#allocation2 + $0x8] sm:$0xff] %vm1261, %v1258
        %v1264 = vld [vmem:[#allocation2] sm:$0xff]
        %v1265 = vld [vmem:[#allocation2 + $0x8] sm:$0xff]
        %v1266 = vpack.c.bf16 %v1265, %v1264
        %v1267 = vld [vmem:[#allocation9] sm:$0xf]
        %v1268 = vld [vmem:[#allocation9 + $0x4] sm:$0xf]
        %v1269 = vld [vmem:[#allocation9 + $0x8] sm:$0xf]
        %v1270 = vld [vmem:[#allocation9 + $0xc] sm:$0xf]
        %v1271 = vld [vmem:[#allocation9 + $0x10] sm:$0xf]
        %v1272 = vld [vmem:[#allocation9 + $0x14] sm:$0xf]
        %v1273 = vld [vmem:[#allocation9 + $0x18] sm:$0xf]
        %v1274 = vld [vmem:[#allocation9 + $0x1c] sm:$0xf]
        %v1275 = vld [vmem:[#allocation9 + $0x20] sm:$0xf]
        %v1276 = vld [vmem:[#allocation9 + $0x24] sm:$0xf]
        %v1277 = vld [vmem:[#allocation9 + $0x28] sm:$0xf]
        %v1278 = vld [vmem:[#allocation9 + $0x2c] sm:$0xf]
        %v1279 = vld [vmem:[#allocation9 + $0x30] sm:$0xf]
        %v1280 = vld [vmem:[#allocation9 + $0x34] sm:$0xf]
        %v1281 = vld [vmem:[#allocation9 + $0x38] sm:$0xf]
        %v1282 = vld [vmem:[#allocation9 + $0x3c] sm:$0xf]
        %v1283 = vld [vmem:[%s5] sm:$0x1]
        %v1285 = vlaneseq
        %v1286 = vshrl.u32 %v1285, 7
        %v1287 = vsub.s32 0, %v1286
        %v1288 = vrot.slane %v1283, %v1287
        %v1306 = vunpack.c.l.b16 %v1267
        %v1307 = vunpack.c.l.b16 %v1268
        %v1308 = vunpack.c.l.b16 %v1269
        %v1309 = vunpack.c.l.b16 %v1270
        %v1310 = vunpack.c.l.b16 %v1271
        %v1311 = vunpack.c.l.b16 %v1272
        %v1312 = vunpack.c.l.b16 %v1273
        %v1313 = vunpack.c.l.b16 %v1274
        %v1314 = vunpack.c.l.b16 %v1275
        %v1315 = vunpack.c.l.b16 %v1276
        %v1316 = vunpack.c.l.b16 %v1277
        %v1317 = vunpack.c.l.b16 %v1278
        %v1318 = vunpack.c.l.b16 %v1279
        %v1319 = vunpack.c.l.b16 %v1280
        %v1320 = vunpack.c.l.b16 %v1281
        %v1321 = vunpack.c.l.b16 %v1282
        %v1322 = vpack.c.b16 %v1307, %v1306
        %v1323 = vpack.c.b16 %v1309, %v1308
        %v1324 = vpack.c.b16 %v1311, %v1310
        %v1325 = vpack.c.b16 %v1313, %v1312
        %v1326 = vpack.c.b16 %v1315, %v1314
        %v1327 = vpack.c.b16 %v1317, %v1316
        %v1328 = vpack.c.b16 %v1319, %v1318
        %v1329 = vpack.c.b16 %v1321, %v1320
        %1338 = vmatprep.subr.bf16.mxu0 0
        %1339 = vmatpush1.bf16.msra.mxu0 %v1329
        %1340 = vmatprep.subr.bf16.mxu0 0
        %1341 = vmatpush1.bf16.msra.mxu0 %v1328
        %1342 = vmatprep.subr.bf16.mxu0 0
        %1343 = vmatpush1.bf16.msra.mxu0 %v1327
        %1344 = vmatprep.subr.bf16.mxu0 0
        %1345 = vmatpush1.bf16.msra.mxu0 %v1326
        %1346 = vmatprep.subr.bf16.mxu0 0
        %1347 = vmatpush1.bf16.msra.mxu0 %v1325
        %1348 = vmatprep.subr.bf16.mxu0 0
        %1349 = vmatpush1.bf16.msra.mxu0 %v1324
        %1350 = vmatprep.subr.bf16.mxu0 0
        %1351 = vmatpush1.bf16.msra.mxu0 %v1323
        %1352 = vmatprep.subr.bf16.mxu0 0
        %1353 = vmatpush1.bf16.msra.mxu0 %v1322
        %1354 = vmatprep.subr.bf16.mxu0 0
        %1355 = vmatpush2.bf16.msra.mxu0 0
        %1356 = vmatprep.subr.bf16.mxu0 0
        %1357 = vmatpush2.bf16.msra.mxu0 0
        %1358 = vmatprep.subr.bf16.mxu0 0
        %1359 = vmatpush2.bf16.msra.mxu0 0
        %1360 = vmatprep.subr.bf16.mxu0 0
        %1361 = vmatpush2.bf16.msra.mxu0 0
        %1362 = vmatprep.subr.bf16.mxu0 0
        %1363 = vmatpush2.bf16.msra.mxu0 0
        %1364 = vmatprep.subr.bf16.mxu0 0
        %1365 = vmatpush2.bf16.msra.mxu0 0
        %1366 = vmatprep.subr.bf16.mxu0 0
        %1367 = vmatpush2.bf16.msra.mxu0 0
        %1368 = vmatprep.subr.bf16.mxu0 0
        %1369 = vmatpush2.bf16.msra.mxu0 0
        %1370 = vmatprep.mubr.bf16.mxu0 0
        %1371 = vmatmul.mubr.bf16.gmra.mxu0 %v1266
        %v1372 = vpop.f32.mrf.mxu0
        %v1373 = vadd.f32 %v1288, %v1372
        %v1374 = vpop.f32.mrf.mxu0
        %v1375 = vpop.f32.mrf.mxu0
        %v1376 = vadd.f32 %v1288, %v1375
        %v1377 = vpop.f32.mrf.mxu0
        %1378 = vdwg.mxu0
        %v1379 = vadd.f32 %v471, %v1373
        %v1380 = vadd.f32 %v472, %v1376
        %1381 = vadd.xlane.f32.xlu0 %v1379
        %v1382 = vpop.xlane.xlu0 %1381
        %1383 = vadd.xlane.f32.xlu0 %v1380
        %v1384 = vpop.xlane.xlu0 %1383
        %v1385 = vrcp.pop 128.0
        %v1386 = vmul.f32 %v1382, %v1385
        %v1387 = vmul.f32 %v1384, %v1385
        %v1388 = vsub.f32 %v1379, %v1386
        %v1389 = vsub.f32 %v1380, %v1387
        %v1390 = vmul.f32 %v1388, %v1388
        %v1391 = vmul.f32 %v1389, %v1389
        %1392 = vadd.xlane.f32.xlu0 %v1390
        %v1393 = vpop.xlane.xlu0 %1392
        %1394 = vadd.xlane.f32.xlu0 %v1391
        %v1395 = vpop.xlane.xlu0 %1394
        %v1396 = vmul.f32 %v1393, %v1385
        %v1397 = vmul.f32 %v1395, %v1385
        %v1398 = vadd.f32 %v1396, 1e-05
        %v1399 = vadd.f32 %v1397, 1e-05
        %v1400 = vrsqrt.pop %v1398
        %v1401 = vrsqrt.pop %v1399
        %v1402 = vmul.f32 %v1388, %v1400
        %v1403 = vmul.f32 %v1389, %v1401
        %v1404 = vpack.c.bf16 %v1403, %v1402
        %v1405 = vld [vmem:[#allocation11] sm:$0xff]
        %v1406 = vld [vmem:[#allocation11 + $0x8] sm:$0xff]
        %v1407 = vld [vmem:[#allocation11 + $0x10] sm:$0xff]
        %v1408 = vld [vmem:[#allocation11 + $0x18] sm:$0xff]
        %v1409 = vld [vmem:[#allocation11 + $0x20] sm:$0xff]
        %v1410 = vld [vmem:[#allocation11 + $0x28] sm:$0xff]
        %v1411 = vld [vmem:[#allocation11 + $0x30] sm:$0xff]
        %v1412 = vld [vmem:[#allocation11 + $0x38] sm:$0xff]
        %v1413 = vld [vmem:[#allocation11 + $0x40] sm:$0xff]
        %v1414 = vld [vmem:[#allocation11 + $0x48] sm:$0xff]
        %v1415 = vld [vmem:[#allocation11 + $0x50] sm:$0xff]
        %v1416 = vld [vmem:[#allocation11 + $0x58] sm:$0xff]
        %v1417 = vld [vmem:[#allocation11 + $0x60] sm:$0xff]
        %v1418 = vld [vmem:[#allocation11 + $0x68] sm:$0xff]
        %v1419 = vld [vmem:[#allocation11 + $0x70] sm:$0xff]
        %v1420 = vld [vmem:[#allocation11 + $0x78] sm:$0xff]
        %v1421 = vld [vmem:[%s7] sm:$0x3]
        %v1423 = vlaneseq
        %v1424 = vshrl.u32 %v1423, 7
        %v1425 = vsub.s32 0, %v1424
        %v1426 = vrot.slane %v1421, %v1425
        %v1427 = vlaneseq
        %v1428 = vshrl.u32 %v1427, 7
        %v1429 = vsub.s32 1, %v1428
        %v1430 = vrot.slane %v1421, %v1429
        %v1449 = vunpack.c.l.b16 %v1405
        %v1450 = vunpack.c.h.b16 %v1405
        %v1451 = vunpack.c.l.b16 %v1406
        %v1452 = vunpack.c.h.b16 %v1406
        %v1453 = vunpack.c.l.b16 %v1407
        %v1454 = vunpack.c.h.b16 %v1407
        %v1455 = vunpack.c.l.b16 %v1408
        %v1456 = vunpack.c.h.b16 %v1408
        %v1457 = vunpack.c.l.b16 %v1409
        %v1458 = vunpack.c.h.b16 %v1409
        %v1459 = vunpack.c.l.b16 %v1410
        %v1460 = vunpack.c.h.b16 %v1410
        %v1461 = vunpack.c.l.b16 %v1411
        %v1462 = vunpack.c.h.b16 %v1411
        %v1463 = vunpack.c.l.b16 %v1412
        %v1464 = vunpack.c.h.b16 %v1412
        %v1465 = vunpack.c.l.b16 %v1413
        %v1466 = vunpack.c.h.b16 %v1413
        %v1467 = vunpack.c.l.b16 %v1414
        %v1468 = vunpack.c.h.b16 %v1414
        %v1469 = vunpack.c.l.b16 %v1415
        %v1470 = vunpack.c.h.b16 %v1415
        %v1471 = vunpack.c.l.b16 %v1416
        %v1472 = vunpack.c.h.b16 %v1416
        %v1473 = vunpack.c.l.b16 %v1417
        %v1474 = vunpack.c.h.b16 %v1417
        %v1475 = vunpack.c.l.b16 %v1418
        %v1476 = vunpack.c.h.b16 %v1418
        %v1477 = vunpack.c.l.b16 %v1419
        %v1478 = vunpack.c.h.b16 %v1419
        %v1479 = vunpack.c.l.b16 %v1420
        %v1480 = vunpack.c.h.b16 %v1420
        %v1481 = vpack.c.b16 %v1451, %v1449
        %v1482 = vpack.c.b16 %v1452, %v1450
        %v1483 = vpack.c.b16 %v1455, %v1453
        %v1484 = vpack.c.b16 %v1456, %v1454
        %v1485 = vpack.c.b16 %v1459, %v1457
        %v1486 = vpack.c.b16 %v1460, %v1458
        %v1487 = vpack.c.b16 %v1463, %v1461
        %v1488 = vpack.c.b16 %v1464, %v1462
        %v1489 = vpack.c.b16 %v1467, %v1465
        %v1490 = vpack.c.b16 %v1468, %v1466
        %v1491 = vpack.c.b16 %v1471, %v1469
        %v1492 = vpack.c.b16 %v1472, %v1470
        %v1493 = vpack.c.b16 %v1475, %v1473
        %v1494 = vpack.c.b16 %v1476, %v1474
        %v1495 = vpack.c.b16 %v1479, %v1477
        %v1496 = vpack.c.b16 %v1480, %v1478
        %1513 = vmatprep.subr.bf16.mxu0 %v1496
        %1514 = vmatpush1.bf16.msra.mxu0 %v1495
        %1515 = vmatprep.subr.bf16.mxu0 %v1494
        %1516 = vmatpush1.bf16.msra.mxu0 %v1493
        %1517 = vmatprep.subr.bf16.mxu0 %v1492
        %1518 = vmatpush1.bf16.msra.mxu0 %v1491
        %1519 = vmatprep.subr.bf16.mxu0 %v1490
        %1520 = vmatpush1.bf16.msra.mxu0 %v1489
        %1521 = vmatprep.subr.bf16.mxu0 %v1488
        %1522 = vmatpush1.bf16.msra.mxu0 %v1487
        %1523 = vmatprep.subr.bf16.mxu0 %v1486
        %1524 = vmatpush1.bf16.msra.mxu0 %v1485
        %1525 = vmatprep.subr.bf16.mxu0 %v1484
        %1526 = vmatpush1.bf16.msra.mxu0 %v1483
        %1527 = vmatprep.subr.bf16.mxu0 %v1482
        %1528 = vmatpush1.bf16.msra.mxu0 %v1481
        %1529 = vmatprep.subr.bf16.mxu0 0
        %1530 = vmatpush2.bf16.msra.mxu0 0
        %1531 = vmatprep.subr.bf16.mxu0 0
        %1532 = vmatpush2.bf16.msra.mxu0 0
        %1533 = vmatprep.subr.bf16.mxu0 0
        %1534 = vmatpush2.bf16.msra.mxu0 0
        %1535 = vmatprep.subr.bf16.mxu0 0
        %1536 = vmatpush2.bf16.msra.mxu0 0
        %1537 = vmatprep.subr.bf16.mxu0 0
        %1538 = vmatpush2.bf16.msra.mxu0 0
        %1539 = vmatprep.subr.bf16.mxu0 0
        %1540 = vmatpush2.bf16.msra.mxu0 0
        %1541 = vmatprep.subr.bf16.mxu0 0
        %1542 = vmatpush2.bf16.msra.mxu0 0
        %1543 = vmatprep.subr.bf16.mxu0 0
        %1544 = vmatpush2.bf16.msra.mxu0 0
        %1545 = vmatprep.mubr.bf16.mxu0 0
        %1546 = vmatmul.mubr.bf16.gmra.mxu0 %v1404
        %v1547 = vpop.f32.mrf.mxu0
        %v1548 = vadd.f32 %v1426, %v1547
        %v1549 = vpop.f32.mrf.mxu0
        %v1550 = vadd.f32 %v1430, %v1549
        %v1551 = vpop.f32.mrf.mxu0
        %v1552 = vadd.f32 %v1426, %v1551
        %v1553 = vpop.f32.mrf.mxu0
        %v1554 = vadd.f32 %v1430, %v1553
        %1555 = vdwg.mxu0
        %v1556 = vmax.f32 %v1548, 0.0
        %v1557 = vmax.f32 %v1550, 0.0
        %v1558 = vmax.f32 %v1552, 0.0
        %v1559 = vmax.f32 %v1554, 0.0
        %v1560 = vpack.c.bf16 %v1558, %v1556
        %v1561 = vpack.c.bf16 %v1559, %v1557
        %v1562 = vld [vmem:[#allocation12] sm:$0xf]
        %v1563 = vld [vmem:[#allocation12 + $0x4] sm:$0xf]
        %v1564 = vld [vmem:[#allocation12 + $0x8] sm:$0xf]
        %v1565 = vld [vmem:[#allocation12 + $0xc] sm:$0xf]
        %v1566 = vld [vmem:[#allocation12 + $0x10] sm:$0xf]
        %v1567 = vld [vmem:[#allocation12 + $0x14] sm:$0xf]
        %v1568 = vld [vmem:[#allocation12 + $0x18] sm:$0xf]
        %v1569 = vld [vmem:[#allocation12 + $0x1c] sm:$0xf]
        %v1570 = vld [vmem:[#allocation12 + $0x20] sm:$0xf]
        %v1571 = vld [vmem:[#allocation12 + $0x24] sm:$0xf]
        %v1572 = vld [vmem:[#allocation12 + $0x28] sm:$0xf]
        %v1573 = vld [vmem:[#allocation12 + $0x2c] sm:$0xf]
        %v1574 = vld [vmem:[#allocation12 + $0x30] sm:$0xf]
        %v1575 = vld [vmem:[#allocation12 + $0x34] sm:$0xf]
        %v1576 = vld [vmem:[#allocation12 + $0x38] sm:$0xf]
        %v1577 = vld [vmem:[#allocation12 + $0x3c] sm:$0xf]
        %v1578 = vld [vmem:[#allocation12 + $0x40] sm:$0xf]
        %v1579 = vld [vmem:[#allocation12 + $0x44] sm:$0xf]
        %v1580 = vld [vmem:[#allocation12 + $0x48] sm:$0xf]
        %v1581 = vld [vmem:[#allocation12 + $0x4c] sm:$0xf]
        %v1582 = vld [vmem:[#allocation12 + $0x50] sm:$0xf]
        %v1583 = vld [vmem:[#allocation12 + $0x54] sm:$0xf]
        %v1584 = vld [vmem:[#allocation12 + $0x58] sm:$0xf]
        %v1585 = vld [vmem:[#allocation12 + $0x5c] sm:$0xf]
        %v1586 = vld [vmem:[#allocation12 + $0x60] sm:$0xf]
        %v1587 = vld [vmem:[#allocation12 + $0x64] sm:$0xf]
        %v1588 = vld [vmem:[#allocation12 + $0x68] sm:$0xf]
        %v1589 = vld [vmem:[#allocation12 + $0x6c] sm:$0xf]
        %v1590 = vld [vmem:[#allocation12 + $0x70] sm:$0xf]
        %v1591 = vld [vmem:[#allocation12 + $0x74] sm:$0xf]
        %v1592 = vld [vmem:[#allocation12 + $0x78] sm:$0xf]
        %v1593 = vld [vmem:[#allocation12 + $0x7c] sm:$0xf]
        %v1594 = vld [vmem:[%s9] sm:$0x1]
        %v1596 = vlaneseq
        %v1597 = vshrl.u32 %v1596, 7
        %v1598 = vsub.s32 0, %v1597
        %v1599 = vrot.slane %v1594, %v1598
        %v1633 = vunpack.c.l.b16 %v1562
        %v1634 = vunpack.c.l.b16 %v1563
        %v1635 = vunpack.c.l.b16 %v1564
        %v1636 = vunpack.c.l.b16 %v1565
        %v1637 = vunpack.c.l.b16 %v1566
        %v1638 = vunpack.c.l.b16 %v1567
        %v1639 = vunpack.c.l.b16 %v1568
        %v1640 = vunpack.c.l.b16 %v1569
        %v1641 = vunpack.c.l.b16 %v1570
        %v1642 = vunpack.c.l.b16 %v1571
        %v1643 = vunpack.c.l.b16 %v1572
        %v1644 = vunpack.c.l.b16 %v1573
        %v1645 = vunpack.c.l.b16 %v1574
        %v1646 = vunpack.c.l.b16 %v1575
        %v1647 = vunpack.c.l.b16 %v1576
        %v1648 = vunpack.c.l.b16 %v1577
        %v1649 = vunpack.c.l.b16 %v1578
        %v1650 = vunpack.c.l.b16 %v1579
        %v1651 = vunpack.c.l.b16 %v1580
        %v1652 = vunpack.c.l.b16 %v1581
        %v1653 = vunpack.c.l.b16 %v1582
        %v1654 = vunpack.c.l.b16 %v1583
        %v1655 = vunpack.c.l.b16 %v1584
        %v1656 = vunpack.c.l.b16 %v1585
        %v1657 = vunpack.c.l.b16 %v1586
        %v1658 = vunpack.c.l.b16 %v1587
        %v1659 = vunpack.c.l.b16 %v1588
        %v1660 = vunpack.c.l.b16 %v1589
        %v1661 = vunpack.c.l.b16 %v1590
        %v1662 = vunpack.c.l.b16 %v1591
        %v1663 = vunpack.c.l.b16 %v1592
        %v1664 = vunpack.c.l.b16 %v1593
        %v1665 = vpack.c.b16 %v1634, %v1633
        %v1666 = vpack.c.b16 %v1636, %v1635
        %v1667 = vpack.c.b16 %v1638, %v1637
        %v1668 = vpack.c.b16 %v1640, %v1639
        %v1669 = vpack.c.b16 %v1642, %v1641
        %v1670 = vpack.c.b16 %v1644, %v1643
        %v1671 = vpack.c.b16 %v1646, %v1645
        %v1672 = vpack.c.b16 %v1648, %v1647
        %v1673 = vpack.c.b16 %v1650, %v1649
        %v1674 = vpack.c.b16 %v1652, %v1651
        %v1675 = vpack.c.b16 %v1654, %v1653
        %v1676 = vpack.c.b16 %v1656, %v1655
        %v1677 = vpack.c.b16 %v1658, %v1657
        %v1678 = vpack.c.b16 %v1660, %v1659
        %v1679 = vpack.c.b16 %v1662, %v1661
        %v1680 = vpack.c.b16 %v1664, %v1663
        %1697 = vmatprep.subr.bf16.mxu0 0
        %1698 = vmatpush1.bf16.msra.mxu0 %v1672
        %1699 = vmatprep.subr.bf16.mxu0 0
        %1700 = vmatpush1.bf16.msra.mxu0 %v1671
        %1701 = vmatprep.subr.bf16.mxu0 0
        %1702 = vmatpush1.bf16.msra.mxu0 %v1670
        %1703 = vmatprep.subr.bf16.mxu0 0
        %1704 = vmatpush1.bf16.msra.mxu0 %v1669
        %1705 = vmatprep.subr.bf16.mxu0 0
        %1706 = vmatpush1.bf16.msra.mxu0 %v1668
        %1707 = vmatprep.subr.bf16.mxu0 0
        %1708 = vmatpush1.bf16.msra.mxu0 %v1667
        %1709 = vmatprep.subr.bf16.mxu0 0
        %1710 = vmatpush1.bf16.msra.mxu0 %v1666
        %1711 = vmatprep.subr.bf16.mxu0 0
        %1712 = vmatpush1.bf16.msra.mxu0 %v1665
        %1713 = vmatprep.subr.bf16.mxu0 0
        %1714 = vmatpush2.bf16.msra.mxu0 %v1680
        %1715 = vmatprep.subr.bf16.mxu0 0
        %1716 = vmatpush2.bf16.msra.mxu0 %v1679
        %1717 = vmatprep.subr.bf16.mxu0 0
        %1718 = vmatpush2.bf16.msra.mxu0 %v1678
        %1719 = vmatprep.subr.bf16.mxu0 0
        %1720 = vmatpush2.bf16.msra.mxu0 %v1677
        %1721 = vmatprep.subr.bf16.mxu0 0
        %1722 = vmatpush2.bf16.msra.mxu0 %v1676
        %1723 = vmatprep.subr.bf16.mxu0 0
        %1724 = vmatpush2.bf16.msra.mxu0 %v1675
        %1725 = vmatprep.subr.bf16.mxu0 0
        %1726 = vmatpush2.bf16.msra.mxu0 %v1674
        %1727 = vmatprep.subr.bf16.mxu0 0
        %1728 = vmatpush2.bf16.msra.mxu0 %v1673
        %1729 = vmatprep.mubr.bf16.mxu0 %v1561
        %1730 = vmatmul.mubr.bf16.gmra.mxu0 %v1560
        %v1731 = vpop.f32.mrf.mxu0
        %v1732 = vadd.f32 %v1599, %v1731
        %v1733 = vpop.f32.mrf.mxu0
        %v1734 = vpop.f32.mrf.mxu0
        %v1735 = vadd.f32 %v1599, %v1734
        %v1736 = vpop.f32.mrf.mxu0
        %1737 = vdwg.mxu0
        %v1738 = vadd.f32 %v1402, %v1732
        %v1739 = vadd.f32 %v1403, %v1735
        %1740 = vadd.xlane.f32.xlu0 %v1738
        %v1741 = vpop.xlane.xlu0 %1740
        %1742 = vadd.xlane.f32.xlu0 %v1739
        %v1743 = vpop.xlane.xlu0 %1742
        %v1744 = vmul.f32 %v1741, %v1385
        %v1745 = vmul.f32 %v1743, %v1385
        %v1746 = vsub.f32 %v1738, %v1744
        %v1747 = vsub.f32 %v1739, %v1745
        %v1748 = vmul.f32 %v1746, %v1746
        %v1749 = vmul.f32 %v1747, %v1747
        %1750 = vadd.xlane.f32.xlu0 %v1748
        %v1751 = vpop.xlane.xlu0 %1750
        %1752 = vadd.xlane.f32.xlu0 %v1749
        %v1753 = vpop.xlane.xlu0 %1752
        %v1754 = vmul.f32 %v1751, %v1385
        %v1755 = vmul.f32 %v1753, %v1385
        %v1756 = vadd.f32 %v1754, 1e-05
        %v1757 = vadd.f32 %v1755, 1e-05
        %v1758 = vrsqrt.pop %v1756
        %v1759 = vrsqrt.pop %v1757
        %v1760 = vmul.f32 %v1746, %v1758
        %v1761 = vmul.f32 %v1747, %v1759
        %1762 = vst [vmem:[%s469] sm:$0xff] %v1760
        %1763 = vst [vmem:[%s469 + $0x8] sm:$0xff] %v1761
        %s1764 = sand.u32 %s260, 1
        %s1765 = scalar_lea.sflag [#allocation5], %s1764
        %s1766 = sand.u32 %s260, 1
        %s1767 = smul.addr %s1766, 16
        %s1768 = scalar_lea.vmem [#allocation14], %s1767
        // Predicated region
        $region85: #{tpu_custom_call.1} parent=59 // pred_check
          %p1769 = pneg %p270
        $region86: #{tpu_custom_call.1} parent=59 // pred_check_branch
          %1771 = sbr.rel (%p1769) target = $region88
        $region87: #{tpu_custom_call.1} parent=59 // pred_region
          %s1773 = ssub.s32 256, 256
          %1774 = vsyncadd %s1765, %s1773
          %s1775 = smul.addr %s32, 2
          %s1776 = smul.addr %s1775, 128
          %s1777 = scalar_lea.hbm %s10, %s1776
          %s1778 = sshll.u32 %s1768, 4
          %s1779 = int_to_ptr.vmem [resolvable:$true] %s1778
          %1784 = dma.vmem_to_hbm [thread:$0]  %s1779, 256, %s1777, %s1765, 128, 128, 8
        $region88: #{tpu_custom_call.1} parent=59 // pred_fallthru
          _
      $region60: #{tpu_custom_call.1} parent=5 // pred_fallthru
        _
      %p1785 = scmp.le.s32.totalorder 2, %s27
      // Predicated region
      $region89: #{tpu_custom_call.1} parent=5 // pred_check
        %p1786 = pneg %p1785
      $region90: #{tpu_custom_call.1} parent=5 // pred_check_branch
        %1788 = sbr.rel (%p1786) target = $region92
      $region91: #{tpu_custom_call.1} parent=5 // pred_region
        %s1789 = ssub.s32 %s27, 2
        // Predicated region
        $region93: #{tpu_custom_call.1} parent=91 // pred_check
          %p1790 = pneg %p276
        $region94: #{tpu_custom_call.1} parent=91 // pred_check_branch
          %1792 = sbr.rel (%p1790) target = $region96
        $region95: #{tpu_custom_call.1} parent=91 // pred_region
          %s1793 = sand.u32 %s261, 1
          %s1794 = scalar_lea.sflag [#allocation5], %s1793
          %s1795 = sand.u32 %s261, 1
          %s1796 = smul.addr %s1795, 16
          %s1797 = scalar_lea.vmem [#allocation14], %s1796
          %1798 = dma.done %s1794, 256
        $region96: #{tpu_custom_call.1} parent=91 // pred_fallthru
          _
      $region92: #{tpu_custom_call.1} parent=5 // pred_fallthru
        _
    $region6: #{tpu_custom_call.1} parent=1 // loop_footer
      %s31 = sadd.s32 1, %s27
    $region7: #{tpu_custom_call.1} parent=1 // loop_footer_branch
      %26 = sbr.rel target = $region3
    $region8: #{tpu_custom_call.1} parent=1 // loop_exit
      _
    %1799 = vsyncpa [#allocation4], 1
    %s1800 = scalar_lea.sflag [#allocation4], 1
    %1801 = vsyncpa %s1800, 1
    %1802 = vsyncpa [#allocation7], 1
    %s1803 = scalar_lea.sflag [#allocation7], 1
    %1804 = vsyncpa %s1803, 1
    %1805 = vsyncpa [#allocation10], 1
    %1806 = vsyncpa [#allocation13], 1
    %1807 = vsyncpa [#allocation5], 1
    %s1808 = scalar_lea.sflag [#allocation5], 1
    %1809 = vsyncpa %s1808, 1

</llo_original>
